<compile_context>
chip_gen: v5e
topology: v5e:2x2
jax: 0.10.0
libtpu: 0.0.40
codegen_flags: <defaults>
</compile_context>

<pallas_src>
import jax
import jax.numpy as jnp
import numpy as np
from jax.experimental import pallas as pl
from jax.experimental.pallas import tpu as pltpu  # noqa: F401  (kept for TPU-specific tuning hooks)

# ---------------- configuration (small shapes) ----------------
B = 2              # batch
C = 4              # channels
IMAGE = 16         # image_size
PATCH = 8          # patch_size
DIM = 32           # embedding dim
DEPTH = 2          # transformer depth
HEADS = 4
DIM_HEAD = 8
INNER = HEADS * DIM_HEAD      # 32
MLP_DIM = 64
NUM_CLASSES = 10
OUT_PAD = 128                 # lane-dense classifier output width
POOL = 'cls'

NP = (IMAGE // PATCH) ** 2    # num_patches = 4
PATCH_DIM = C * PATCH * PATCH # 256
S = NP + 1                    # sequence length (with cls token) = 5
N = B * S                     # total token rows across the batch = 10
EPS = 1e-5
NEG_INF = -1e30


# ---------------- Pallas kernel ----------------
def _layer_norm(x, g, b):
    mu = jnp.mean(x, axis=-1, keepdims=True)
    var = jnp.mean(jnp.square(x - mu), axis=-1, keepdims=True)
    return (x - mu) * jax.lax.rsqrt(var + EPS) * g + b


def vit_kernel(
    patches_ref,          # (N, PATCH_DIM)  zero rows at cls positions
    addc_ref,             # (N, DIM)        pos(+pb) on patch rows, cls+pos[0] on cls rows
    mask_ref,             # (N, N)          0 within a batch element, -1e30 across
    sel_ref,              # (B, N)          one-hot cls-row selector
    pw_ref,               # (PATCH_DIM, DIM)
    ln1g_ref, ln1b_ref,   # (DEPTH, 1, DIM)
    wqkv_ref,             # (DEPTH, HEADS, DIM, 3*DIM_HEAD)  (scale folded into q cols; no bias)
    wo_ref,               # (DEPTH, HEADS, DIM_HEAD, DIM)
    bo_ref,               # (DEPTH, 1, DIM)
    ln2g_ref, ln2b_ref,   # (DEPTH, 1, DIM)
    w1_ref, b1_ref,       # (DEPTH, DIM, MLP_DIM), (DEPTH, 1, MLP_DIM)
    w2_ref, b2_ref,       # (DEPTH, MLP_DIM, DIM), (DEPTH, 1, DIM)
    lnfg_ref, lnfb_ref,   # (1, DIM)
    hw_ref, hb_ref,       # (DIM, OUT_PAD), (1, OUT_PAD)   (classes zero-padded to 128 lanes)
    out_ref,              # (B, OUT_PAD)
):
    # ----- patch_to_embedding + cls prepend + pos add: ONE matmul + ONE add.
    # cls rows of patches_ref are zero, so they contribute nothing to the
    # matmul; the precomputed additive constant supplies cls_token + pos (and
    # pb only on the real patch rows). -----
    x = jnp.dot(patches_ref[...], pw_ref[...],
                preferred_element_type=jnp.float32) + addc_ref[...]      # (N, DIM)

    mask = mask_ref[...]                 # hoisted once; reused every layer

    # ----- transformer: depth x (pre-norm attention + pre-norm FFN) -----
    # DEPTH=2 with ~0.1 MB of weights => fully-resident unrolled loop is fine.
    # At real depth, switch to a depth grid axis ("arbitrary") with weight
    # BlockSpecs indexed on d and an x VMEM accumulator.
    for d in range(DEPTH):
        # --- attention (softmax scale already folded into wqkv q cols) ---
        hn = _layer_norm(x, ln1g_ref[d], ln1b_ref[d])                     # (N, DIM)

        # Head-batched QKV projection: produces head-major (H, N, 3*Dh)
        # directly — no VMEM relayout, no width-8 slices into scratch.
        hnb = jnp.broadcast_to(hn, (HEADS, N, DIM))                       # (H, N, DIM)
        qkv = jnp.einsum('hnd,hde->hne', hnb, wqkv_ref[d],
                         preferred_element_type=jnp.float32)              # (H, N, 3*Dh)
        q3 = qkv[..., :DIM_HEAD]                                          # (H, N, Dh)
        k3 = qkv[..., DIM_HEAD:2 * DIM_HEAD]
        v3 = qkv[..., 2 * DIM_HEAD:]

        # all heads + all batch elements in one batched einsum; the additive
        # mask kills cross-batch attention (exp(-1e30 - max) == 0 in f32)
        s = jnp.einsum('hqd,hkd->hqk', q3, k3,
                       preferred_element_type=jnp.float32) + mask         # (H, N, N)
        s = s - jnp.max(s, axis=-1, keepdims=True)
        e = jnp.exp(s)
        p = e * pl.reciprocal(jnp.sum(e, axis=-1, keepdims=True), approx=True)
        o3 = jnp.einsum('hqk,hkd->hqd', p, v3,
                        preferred_element_type=jnp.float32)               # (H, N, Dh)

        # output projection: head-batched matmul + cross-head sum
        # (mathematically identical to concat_h(O_h) @ W_o; kept head-batched
        # so no value relayout back to (N, INNER) is needed)
        proj = jnp.einsum('hqd,hde->hqe', o3, wo_ref[d],
                          preferred_element_type=jnp.float32)             # (H, N, DIM)
        x = x + jnp.sum(proj, axis=0) + bo_ref[d]

        # --- feed-forward block ---
        hn = _layer_norm(x, ln2g_ref[d], ln2b_ref[d])
        hn = jnp.dot(hn, w1_ref[d], preferred_element_type=jnp.float32) + b1_ref[d]
        hn = jax.nn.gelu(hn, approximate=True)  # TODO(synk): nn.GELU default is exact erf; tanh approx used for Mosaic-safe lowering
        hn = jnp.dot(hn, w2_ref[d], preferred_element_type=jnp.float32) + b2_ref[d]
        x = x + hn

    # ----- pool ('cls') via a one-hot select matmul (no per-row stores),
    #       then mlp_head (LayerNorm -> Linear, lane-padded to 128) -----
    cls_out = jnp.dot(sel_ref[...], x, preferred_element_type=jnp.float32)   # (B, DIM)
    cls_out = _layer_norm(cls_out, lnfg_ref[...], lnfb_ref[...])
    out_ref[...] = jnp.dot(cls_out, hw_ref[...],
                           preferred_element_type=jnp.float32) + hb_ref[...]


# ---------------- wrapper ----------------
def vit_forward(img, params):
    # plain-JAX glue: einops rearrange 'b c (h p1) (w p2) -> b (h w) (p1 p2 c)'
    b, c, H, W = img.shape
    gh, gw = H // PATCH, W // PATCH
    patches = img.reshape(b, c, gh, PATCH, gw, PATCH)
    patches = patches.transpose(0, 2, 4, 3, 5, 1)                 # b h w p1 p2 c
    patches = patches.reshape(b, gh * gw, PATCH * PATCH * c)      # (B, NP, PATCH_DIM)

    # zero row at each cls position -> (B*S, PATCH_DIM); rows ordered (batch, seq)
    patches_pad = jnp.concatenate(
        [jnp.zeros((b, 1, PATCH_DIM), jnp.float32), patches], axis=1
    ).reshape(b * S, PATCH_DIM)

    # additive constant: cls rows = cls_token + pos[0] ; patch rows = pos[1+j] + pb
    addc = jnp.concatenate(
        [params['cls'] + params['pos'][0:1], params['pos'][1:S] + params['pb']],
        axis=0)                                                   # (S, DIM)
    addc = jnp.tile(addc, (b, 1))                                 # (B*S, DIM)

    # static additive mask: 0 within the same batch element, -1e30 across
    row_b = np.arange(b * S) // S
    mask = jnp.asarray(
        np.where(row_b[:, None] == row_b[None, :], 0.0, NEG_INF).astype(np.float32))

    # one-hot selector picking the cls row of each batch element
    sel_np = np.zeros((b, b * S), np.float32)
    sel_np[np.arange(b), np.arange(b) * S] = 1.0
    sel = jnp.asarray(sel_np)

    # head-major weight views (wrapper-side metadata reshapes/transposes)
    wqkv_h = params['wqkv'].reshape(DEPTH, DIM, 3, HEADS, DIM_HEAD)
    wqkv_h = wqkv_h.transpose(0, 3, 1, 2, 4).reshape(DEPTH, HEADS, DIM, 3 * DIM_HEAD)
    wo_h = params['wo'].reshape(DEPTH, HEADS, DIM_HEAD, DIM)

    # lane-dense classifier head: pad classes 10 -> 128 with zero columns
    hw_pad = jnp.zeros((DIM, OUT_PAD), jnp.float32).at[:, :NUM_CLASSES].set(params['hw'])
    hb_pad = jnp.zeros((1, OUT_PAD), jnp.float32).at[:, :NUM_CLASSES].set(params['hb'])

    ordered = [
        patches_pad, addc, mask, sel,
        params['pw'],
        params['ln1g'], params['ln1b'],
        wqkv_h, wo_h, params['bo'],
        params['ln2g'], params['ln2b'],
        params['w1'], params['b1'],
        params['w2'], params['b2'],
        params['lnfg'], params['lnfb'],
        hw_pad, hb_pad,
    ]

    # Single gridless invocation: every operand is tiny and lives whole in
    # VMEM, no scratch buffers needed.  (At real sizes: depth grid axis for
    # weight streaming + a parallel batch/query axis for v7x's 2 TensorCores.)
    out = pl.pallas_call(
        vit_kernel,
        out_shape=jax.ShapeDtypeStruct((b, OUT_PAD), jnp.float32),
    )(*ordered)
    return out[:, :NUM_CLASSES]


# ---------------- deterministic parameter init ----------------
def init_params(key):
    ks = iter(jax.random.split(key, 32))

    def randn(shape, scale=1.0):
        return (jax.random.normal(next(ks), shape) * scale).astype(jnp.float32)

    wqkv = randn((DEPTH, DIM, 3 * INNER), 0.02)        # no bias (vit-pytorch Attention)
    # fold the attention scale into the q columns (reparameterization; the
    # reference below therefore applies no extra scale to the scores)
    wqkv = wqkv.at[:, :, :INNER].multiply(DIM_HEAD ** -0.5)

    p = {
        'pos':  randn((S, DIM)),                       # pos_embedding (1, n+1, dim)
        'cls':  randn((1, DIM)),                       # cls_token
        'pw':   randn((PATCH_DIM, DIM), 0.02),         # patch_to_embedding (pre-transposed)
        'pb':   randn((1, DIM), 0.02),
        'ln1g': jnp.ones((DEPTH, 1, DIM), jnp.float32),
        'ln1b': jnp.zeros((DEPTH, 1, DIM), jnp.float32),
        'wqkv': wqkv,
        'wo':   randn((DEPTH, INNER, DIM), 0.02),
        'bo':   randn((DEPTH, 1, DIM), 0.02),
        'ln2g': jnp.ones((DEPTH, 1, DIM), jnp.float32),
        'ln2b': jnp.zeros((DEPTH, 1, DIM), jnp.float32),
        'w1':   randn((DEPTH, DIM, MLP_DIM), 0.02),
        'b1':   randn((DEPTH, 1, MLP_DIM), 0.02),
        'w2':   randn((DEPTH, MLP_DIM, DIM), 0.02),
        'b2':   randn((DEPTH, 1, DIM), 0.02),
        'lnfg': jnp.ones((1, DIM), jnp.float32),
        'lnfb': jnp.zeros((1, DIM), jnp.float32),
        'hw':   randn((DIM, NUM_CLASSES), 0.02),
        'hb':   randn((1, NUM_CLASSES), 0.02),
    }
    return p


# ---------------- pure-JAX reference (for sanity check) ----------------
def vit_reference(img, p):
    b, c, H, W = img.shape
    gh, gw = H // PATCH, W // PATCH
    x = img.reshape(b, c, gh, PATCH, gw, PATCH).transpose(0, 2, 4, 3, 5, 1)
    x = x.reshape(b, gh * gw, PATCH * PATCH * c)
    x = x @ p['pw'] + p['pb']
    cls = jnp.broadcast_to(p['cls'][None], (b, 1, DIM))
    x = jnp.concatenate([cls, x], axis=1) + p['pos'][None]

    def ln(x, g, bb):
        mu = x.mean(-1, keepdims=True)
        var = ((x - mu) ** 2).mean(-1, keepdims=True)
        return (x - mu) / jnp.sqrt(var + EPS) * g + bb

    for d in range(DEPTH):
        hh = ln(x, p['ln1g'][d, 0], p['ln1b'][d, 0])
        qkv = hh @ p['wqkv'][d]
        q, k, v = jnp.split(qkv, 3, axis=-1)
        sh = lambda t: t.reshape(b, S, HEADS, DIM_HEAD).transpose(0, 2, 1, 3)
        q, k, v = sh(q), sh(k), sh(v)
        # attention scale already folded into the q columns of wqkv (see init)
        s = jnp.einsum('bhqd,bhkd->bhqk', q, k)
        a = jax.nn.softmax(s, axis=-1)
        o = jnp.einsum('bhqk,bhkd->bhqd', a, v).transpose(0, 2, 1, 3).reshape(b, S, INNER)
        x = x + (o @ p['wo'][d] + p['bo'][d, 0])
        hh = ln(x, p['ln2g'][d, 0], p['ln2b'][d, 0])
        hh = jax.nn.gelu(hh @ p['w1'][d] + p['b1'][d, 0], approximate=True)
        x = x + (hh @ p['w2'][d] + p['b2'][d, 0])

    cls_out = x[:, 0]                                   # pool == 'cls'
    cls_out = ln(cls_out, p['lnfg'][0], p['lnfb'][0])
    return cls_out @ p['hw'] + p['hb']


if __name__ == "__main__":
    key = jax.random.PRNGKey(0)
    k_img, k_par = jax.random.split(key)
    img = jax.random.normal(k_img, (B, C, IMAGE, IMAGE), dtype=jnp.float32)
    params = init_params(k_par)

    out = vit_forward(img, params)
    out = jax.block_until_ready(out)
    assert out.shape == (B, NUM_CLASSES)

    ref = jax.block_until_ready(vit_reference(img, params))
    np.testing.assert_allclose(np.asarray(out), np.asarray(ref), rtol=2e-2, atol=2e-2)

    print("KERNEL_OK")
</pallas_src>

<mosaic_0001>
module attributes {stable_mosaic.version = 11 : i64} {
  func.func @vit_kernel(%arg0: memref<10x256xf32, #tpu.memory_space<vmem>>, %arg1: memref<10x32xf32, #tpu.memory_space<vmem>>, %arg2: memref<10x10xf32, #tpu.memory_space<vmem>>, %arg3: memref<2x10xf32, #tpu.memory_space<vmem>>, %arg4: memref<256x32xf32, #tpu.memory_space<vmem>>, %arg5: memref<2x1x32xf32, #tpu.memory_space<vmem>>, %arg6: memref<2x1x32xf32, #tpu.memory_space<vmem>>, %arg7: memref<2x4x32x24xf32, #tpu.memory_space<vmem>>, %arg8: memref<2x4x8x32xf32, #tpu.memory_space<vmem>>, %arg9: memref<2x1x32xf32, #tpu.memory_space<vmem>>, %arg10: memref<2x1x32xf32, #tpu.memory_space<vmem>>, %arg11: memref<2x1x32xf32, #tpu.memory_space<vmem>>, %arg12: memref<2x32x64xf32, #tpu.memory_space<vmem>>, %arg13: memref<2x1x64xf32, #tpu.memory_space<vmem>>, %arg14: memref<2x64x32xf32, #tpu.memory_space<vmem>>, %arg15: memref<2x1x32xf32, #tpu.memory_space<vmem>>, %arg16: memref<1x32xf32, #tpu.memory_space<vmem>>, %arg17: memref<1x32xf32, #tpu.memory_space<vmem>>, %arg18: memref<32x128xf32, #tpu.memory_space<vmem>>, %arg19: memref<1x128xf32, #tpu.memory_space<vmem>>, %arg20: memref<2x128xf32, #tpu.memory_space<vmem>>) attributes {dimension_semantics = [], scalar_prefetch = 0 : i64, scratch_operands = 0 : i64, tpu.core_type = #tpu.core_type<tc>} {
    %c0 = arith.constant 0 : index
    %c0_0 = arith.constant 0 : index
    %0 = vector.load %arg0[%c0, %c0_0] : memref<10x256xf32, #tpu.memory_space<vmem>>, vector<10x256xf32>
    %c0_1 = arith.constant 0 : index
    %c0_2 = arith.constant 0 : index
    %1 = vector.load %arg4[%c0_1, %c0_2] : memref<256x32xf32, #tpu.memory_space<vmem>>, vector<256x32xf32>
    %cst = arith.constant dense<0.000000e+00> : vector<10x32xf32>
    %2 = tpu.matmul %0, %1, %cst {dimension_numbers = #tpu.dot_dimension_numbers<[1], [0], [0], [1], [0, 0, 1, 1], [], []>} : vector<10x256xf32>, vector<256x32xf32>, vector<10x32xf32> -> vector<10x32xf32>
    %c0_3 = arith.constant 0 : index
    %c0_4 = arith.constant 0 : index
    %3 = vector.load %arg1[%c0_3, %c0_4] : memref<10x32xf32, #tpu.memory_space<vmem>>, vector<10x32xf32>
    %4 = arith.addf %2, %3 : vector<10x32xf32>
    %c0_5 = arith.constant 0 : index
    %c0_6 = arith.constant 0 : index
    %5 = vector.load %arg2[%c0_5, %c0_6] : memref<10x10xf32, #tpu.memory_space<vmem>>, vector<10x10xf32>
    %c0_7 = arith.constant 0 : index
    %c0_8 = arith.constant 0 : index
    %c0_9 = arith.constant 0 : index
    %6 = vector.load %arg5[%c0_7, %c0_8, %c0_9] : memref<2x1x32xf32, #tpu.memory_space<vmem>>, vector<1x1x32xf32>
    %7 = vector.shape_cast %6 : vector<1x1x32xf32> to vector<1x32xf32>
    %c0_10 = arith.constant 0 : index
    %c0_11 = arith.constant 0 : index
    %c0_12 = arith.constant 0 : index
    %8 = vector.load %arg6[%c0_10, %c0_11, %c0_12] : memref<2x1x32xf32, #tpu.memory_space<vmem>>, vector<1x1x32xf32>
    %9 = vector.shape_cast %8 : vector<1x1x32xf32> to vector<1x32xf32>
    %cst_13 = arith.constant dense<0.000000e+00> : vector<10xf32>
    %10 = vector.multi_reduction <add>, %4, %cst_13 [1] : vector<10x32xf32> to vector<10xf32>
    %11 = vector.shape_cast %10 : vector<10xf32> to vector<10x1xf32>
    %cst_14 = arith.constant 3.200000e+01 : f32
    %12 = vector.broadcast %cst_14 : f32 to vector<10x1xf32>
    %13 = arith.divf %11, %12 : vector<10x1xf32>
    %14 = vector.broadcast %13 : vector<10x1xf32> to vector<10x32xf32>
    %15 = arith.subf %4, %14 : vector<10x32xf32>
    %16 = arith.mulf %15, %15 : vector<10x32xf32>
    %cst_15 = arith.constant dense<0.000000e+00> : vector<10xf32>
    %17 = vector.multi_reduction <add>, %16, %cst_15 [1] : vector<10x32xf32> to vector<10xf32>
    %18 = vector.shape_cast %17 : vector<10xf32> to vector<10x1xf32>
    %cst_16 = arith.constant 3.200000e+01 : f32
    %19 = vector.broadcast %cst_16 : f32 to vector<10x1xf32>
    %20 = arith.divf %18, %19 : vector<10x1xf32>
    %21 = vector.broadcast %13 : vector<10x1xf32> to vector<10x32xf32>
    %22 = arith.subf %4, %21 : vector<10x32xf32>
    %cst_17 = arith.constant 9.99999974E-6 : f32
    %23 = vector.broadcast %cst_17 : f32 to vector<10x1xf32>
    %24 = arith.addf %20, %23 : vector<10x1xf32>
    %25 = math.rsqrt %24 : vector<10x1xf32>
    %26 = vector.broadcast %25 : vector<10x1xf32> to vector<10x32xf32>
    %27 = arith.mulf %22, %26 : vector<10x32xf32>
    %28 = vector.broadcast %7 : vector<1x32xf32> to vector<10x32xf32>
    %29 = arith.mulf %27, %28 : vector<10x32xf32>
    %30 = vector.broadcast %9 : vector<1x32xf32> to vector<10x32xf32>
    %31 = arith.addf %29, %30 : vector<10x32xf32>
    %32 = vector.shape_cast %31 : vector<10x32xf32> to vector<1x10x32xf32>
    %33 = vector.broadcast %32 : vector<1x10x32xf32> to vector<4x10x32xf32>
    %c0_18 = arith.constant 0 : index
    %c0_19 = arith.constant 0 : index
    %c0_20 = arith.constant 0 : index
    %c0_21 = arith.constant 0 : index
    %34 = vector.load %arg7[%c0_18, %c0_19, %c0_20, %c0_21] : memref<2x4x32x24xf32, #tpu.memory_space<vmem>>, vector<1x4x32x24xf32>
    %35 = vector.shape_cast %34 : vector<1x4x32x24xf32> to vector<4x32x24xf32>
    "tpu.trace_start"() <{level = 10 : i32, message = "hnd,hde->hne"}> : () -> ()
    %cst_22 = arith.constant dense<0.000000e+00> : vector<4x10x24xf32>
    %36 = tpu.matmul %33, %35, %cst_22 {dimension_numbers = #tpu.dot_dimension_numbers<[2], [1], [1], [2], [0, 0, 0, 1, 1, 2], [0], [0]>} : vector<4x10x32xf32>, vector<4x32x24xf32>, vector<4x10x24xf32> -> vector<4x10x24xf32>
    "tpu.trace_stop"() : () -> ()
    %37 = vector.extract_strided_slice %36 {offsets = [0, 0, 0], sizes = [4, 10, 8], strides = [1, 1, 1]} : vector<4x10x24xf32> to vector<4x10x8xf32>
    %38 = vector.extract_strided_slice %36 {offsets = [0, 0, 8], sizes = [4, 10, 8], strides = [1, 1, 1]} : vector<4x10x24xf32> to vector<4x10x8xf32>
    %39 = vector.extract_strided_slice %36 {offsets = [0, 0, 16], sizes = [4, 10, 8], strides = [1, 1, 1]} : vector<4x10x24xf32> to vector<4x10x8xf32>
    "tpu.trace_start"() <{level = 10 : i32, message = "hqd,hkd->hqk"}> : () -> ()
    %cst_23 = arith.constant dense<0.000000e+00> : vector<4x10x10xf32>
    %40 = tpu.matmul %37, %38, %cst_23 {dimension_numbers = #tpu.dot_dimension_numbers<[2], [2], [1], [1], [0, 0, 0, 1, 1, 1], [0], [0]>} : vector<4x10x8xf32>, vector<4x10x8xf32>, vector<4x10x10xf32> -> vector<4x10x10xf32>
    "tpu.trace_stop"() : () -> ()
    %41 = vector.shape_cast %5 : vector<10x10xf32> to vector<1x10x10xf32>
    %42 = vector.broadcast %41 : vector<1x10x10xf32> to vector<4x10x10xf32>
    %43 = arith.addf %40, %42 : vector<4x10x10xf32>
    %cst_24 = arith.constant dense<0xFF800000> : vector<4x10xf32>
    %44 = vector.multi_reduction <maximumf>, %43, %cst_24 [2] : vector<4x10x10xf32> to vector<4x10xf32>
    %45 = vector.shape_cast %44 : vector<4x10xf32> to vector<4x10x1xf32>
    %46 = vector.broadcast %45 : vector<4x10x1xf32> to vector<4x10x10xf32>
    %47 = arith.subf %43, %46 : vector<4x10x10xf32>
    %48 = math.exp %47 : vector<4x10x10xf32>
    %cst_25 = arith.constant dense<0.000000e+00> : vector<4x10xf32>
    %49 = vector.multi_reduction <add>, %48, %cst_25 [2] : vector<4x10x10xf32> to vector<4x10xf32>
    %50 = vector.shape_cast %49 : vector<4x10xf32> to vector<4x10x1xf32>
    %51 = tpu.reciprocal %50 {approx = true} : vector<4x10x1xf32> -> vector<4x10x1xf32>
    %52 = vector.broadcast %51 : vector<4x10x1xf32> to vector<4x10x10xf32>
    %53 = arith.mulf %48, %52 : vector<4x10x10xf32>
    "tpu.trace_start"() <{level = 10 : i32, message = "hqk,hkd->hqd"}> : () -> ()
    %cst_26 = arith.constant dense<0.000000e+00> : vector<4x10x8xf32>
    %54 = tpu.matmul %53, %39, %cst_26 {dimension_numbers = #tpu.dot_dimension_numbers<[2], [1], [1], [2], [0, 0, 0, 1, 1, 2], [0], [0]>} : vector<4x10x10xf32>, vector<4x10x8xf32>, vector<4x10x8xf32> -> vector<4x10x8xf32>
    "tpu.trace_stop"() : () -> ()
    %c0_27 = arith.constant 0 : index
    %c0_28 = arith.constant 0 : index
    %c0_29 = arith.constant 0 : index
    %c0_30 = arith.constant 0 : index
    %55 = vector.load %arg8[%c0_27, %c0_28, %c0_29, %c0_30] : memref<2x4x8x32xf32, #tpu.memory_space<vmem>>, vector<1x4x8x32xf32>
    %56 = vector.shape_cast %55 : vector<1x4x8x32xf32> to vector<4x8x32xf32>
    "tpu.trace_start"() <{level = 10 : i32, message = "hqd,hde->hqe"}> : () -> ()
    %cst_31 = arith.constant dense<0.000000e+00> : vector<4x10x32xf32>
    %57 = tpu.matmul %54, %56, %cst_31 {dimension_numbers = #tpu.dot_dimension_numbers<[2], [1], [1], [2], [0, 0, 0, 1, 1, 2], [0], [0]>} : vector<4x10x8xf32>, vector<4x8x32xf32>, vector<4x10x32xf32> -> vector<4x10x32xf32>
    "tpu.trace_stop"() : () -> ()
    %cst_32 = arith.constant dense<0.000000e+00> : vector<10x32xf32>
    %58 = vector.multi_reduction <add>, %57, %cst_32 [0] : vector<4x10x32xf32> to vector<10x32xf32>
    %59 = arith.addf %4, %58 : vector<10x32xf32>
    %c0_33 = arith.constant 0 : index
    %c0_34 = arith.constant 0 : index
    %c0_35 = arith.constant 0 : index
    %60 = vector.load %arg9[%c0_33, %c0_34, %c0_35] : memref<2x1x32xf32, #tpu.memory_space<vmem>>, vector<1x1x32xf32>
    %61 = vector.shape_cast %60 : vector<1x1x32xf32> to vector<1x32xf32>
    %62 = vector.broadcast %61 : vector<1x32xf32> to vector<10x32xf32>
    %63 = arith.addf %59, %62 : vector<10x32xf32>
    %c0_36 = arith.constant 0 : index
    %c0_37 = arith.constant 0 : index
    %c0_38 = arith.constant 0 : index
    %64 = vector.load %arg10[%c0_36, %c0_37, %c0_38] : memref<2x1x32xf32, #tpu.memory_space<vmem>>, vector<1x1x32xf32>
    %65 = vector.shape_cast %64 : vector<1x1x32xf32> to vector<1x32xf32>
    %c0_39 = arith.constant 0 : index
    %c0_40 = arith.constant 0 : index
    %c0_41 = arith.constant 0 : index
    %66 = vector.load %arg11[%c0_39, %c0_40, %c0_41] : memref<2x1x32xf32, #tpu.memory_space<vmem>>, vector<1x1x32xf32>
    %67 = vector.shape_cast %66 : vector<1x1x32xf32> to vector<1x32xf32>
    %cst_42 = arith.constant dense<0.000000e+00> : vector<10xf32>
    %68 = vector.multi_reduction <add>, %63, %cst_42 [1] : vector<10x32xf32> to vector<10xf32>
    %69 = vector.shape_cast %68 : vector<10xf32> to vector<10x1xf32>
    %cst_43 = arith.constant 3.200000e+01 : f32
    %70 = vector.broadcast %cst_43 : f32 to vector<10x1xf32>
    %71 = arith.divf %69, %70 : vector<10x1xf32>
    %72 = vector.broadcast %71 : vector<10x1xf32> to vector<10x32xf32>
    %73 = arith.subf %63, %72 : vector<10x32xf32>
    %74 = arith.mulf %73, %73 : vector<10x32xf32>
    %cst_44 = arith.constant dense<0.000000e+00> : vector<10xf32>
    %75 = vector.multi_reduction <add>, %74, %cst_44 [1] : vector<10x32xf32> to vector<10xf32>
    %76 = vector.shape_cast %75 : vector<10xf32> to vector<10x1xf32>
    %cst_45 = arith.constant 3.200000e+01 : f32
    %77 = vector.broadcast %cst_45 : f32 to vector<10x1xf32>
    %78 = arith.divf %76, %77 : vector<10x1xf32>
    %79 = vector.broadcast %71 : vector<10x1xf32> to vector<10x32xf32>
    %80 = arith.subf %63, %79 : vector<10x32xf32>
    %cst_46 = arith.constant 9.99999974E-6 : f32
    %81 = vector.broadcast %cst_46 : f32 to vector<10x1xf32>
    %82 = arith.addf %78, %81 : vector<10x1xf32>
    %83 = math.rsqrt %82 : vector<10x1xf32>
    %84 = vector.broadcast %83 : vector<10x1xf32> to vector<10x32xf32>
    %85 = arith.mulf %80, %84 : vector<10x32xf32>
    %86 = vector.broadcast %65 : vector<1x32xf32> to vector<10x32xf32>
    %87 = arith.mulf %85, %86 : vector<10x32xf32>
    %88 = vector.broadcast %67 : vector<1x32xf32> to vector<10x32xf32>
    %89 = arith.addf %87, %88 : vector<10x32xf32>
    %c0_47 = arith.constant 0 : index
    %c0_48 = arith.constant 0 : index
    %c0_49 = arith.constant 0 : index
    %90 = vector.load %arg12[%c0_47, %c0_48, %c0_49] : memref<2x32x64xf32, #tpu.memory_space<vmem>>, vector<1x32x64xf32>
    %91 = vector.shape_cast %90 : vector<1x32x64xf32> to vector<32x64xf32>
    %cst_50 = arith.constant dense<0.000000e+00> : vector<10x64xf32>
    %92 = tpu.matmul %89, %91, %cst_50 {dimension_numbers = #tpu.dot_dimension_numbers<[1], [0], [0], [1], [0, 0, 1, 1], [], []>} : vector<10x32xf32>, vector<32x64xf32>, vector<10x64xf32> -> vector<10x64xf32>
    %c0_51 = arith.constant 0 : index
    %c0_52 = arith.constant 0 : index
    %c0_53 = arith.constant 0 : index
    %93 = vector.load %arg13[%c0_51, %c0_52, %c0_53] : memref<2x1x64xf32, #tpu.memory_space<vmem>>, vector<1x1x64xf32>
    %94 = vector.shape_cast %93 : vector<1x1x64xf32> to vector<1x64xf32>
    %95 = vector.broadcast %94 : vector<1x64xf32> to vector<10x64xf32>
    %96 = arith.addf %92, %95 : vector<10x64xf32>
    %97 = arith.mulf %96, %96 : vector<10x64xf32>
    %98 = arith.mulf %96, %97 : vector<10x64xf32>
    %cst_54 = arith.constant 4.471500e-02 : f32
    %99 = vector.broadcast %cst_54 : f32 to vector<10x64xf32>
    %100 = arith.mulf %99, %98 : vector<10x64xf32>
    %101 = arith.addf %96, %100 : vector<10x64xf32>
    %cst_55 = arith.constant 0.797884583 : f32
    %102 = vector.broadcast %cst_55 : f32 to vector<10x64xf32>
    %103 = arith.mulf %102, %101 : vector<10x64xf32>
    %104 = math.tanh %103 : vector<10x64xf32>
    %cst_56 = arith.constant 1.000000e+00 : f32
    %105 = vector.broadcast %cst_56 : f32 to vector<10x64xf32>
    %106 = arith.addf %105, %104 : vector<10x64xf32>
    %cst_57 = arith.constant 5.000000e-01 : f32
    %107 = vector.broadcast %cst_57 : f32 to vector<10x64xf32>
    %108 = arith.mulf %107, %106 : vector<10x64xf32>
    %109 = arith.mulf %96, %108 : vector<10x64xf32>
    %c0_58 = arith.constant 0 : index
    %c0_59 = arith.constant 0 : index
    %c0_60 = arith.constant 0 : index
    %110 = vector.load %arg14[%c0_58, %c0_59, %c0_60] : memref<2x64x32xf32, #tpu.memory_space<vmem>>, vector<1x64x32xf32>
    %111 = vector.shape_cast %110 : vector<1x64x32xf32> to vector<64x32xf32>
    %cst_61 = arith.constant dense<0.000000e+00> : vector<10x32xf32>
    %112 = tpu.matmul %109, %111, %cst_61 {dimension_numbers = #tpu.dot_dimension_numbers<[1], [0], [0], [1], [0, 0, 1, 1], [], []>} : vector<10x64xf32>, vector<64x32xf32>, vector<10x32xf32> -> vector<10x32xf32>
    %c0_62 = arith.constant 0 : index
    %c0_63 = arith.constant 0 : index
    %c0_64 = arith.constant 0 : index
    %113 = vector.load %arg15[%c0_62, %c0_63, %c0_64] : memref<2x1x32xf32, #tpu.memory_space<vmem>>, vector<1x1x32xf32>
    %114 = vector.shape_cast %113 : vector<1x1x32xf32> to vector<1x32xf32>
    %115 = vector.broadcast %114 : vector<1x32xf32> to vector<10x32xf32>
    %116 = arith.addf %112, %115 : vector<10x32xf32>
    %117 = arith.addf %63, %116 : vector<10x32xf32>
    %c1 = arith.constant 1 : index
    %c0_65 = arith.constant 0 : index
    %c0_66 = arith.constant 0 : index
    %118 = vector.load %arg5[%c1, %c0_65, %c0_66] : memref<2x1x32xf32, #tpu.memory_space<vmem>>, vector<1x1x32xf32>
    %119 = vector.shape_cast %118 : vector<1x1x32xf32> to vector<1x32xf32>
    %c1_67 = arith.constant 1 : index
    %c0_68 = arith.constant 0 : index
    %c0_69 = arith.constant 0 : index
    %120 = vector.load %arg6[%c1_67, %c0_68, %c0_69] : memref<2x1x32xf32, #tpu.memory_space<vmem>>, vector<1x1x32xf32>
    %121 = vector.shape_cast %120 : vector<1x1x32xf32> to vector<1x32xf32>
    %cst_70 = arith.constant dense<0.000000e+00> : vector<10xf32>
    %122 = vector.multi_reduction <add>, %117, %cst_70 [1] : vector<10x32xf32> to vector<10xf32>
    %123 = vector.shape_cast %122 : vector<10xf32> to vector<10x1xf32>
    %cst_71 = arith.constant 3.200000e+01 : f32
    %124 = vector.broadcast %cst_71 : f32 to vector<10x1xf32>
    %125 = arith.divf %123, %124 : vector<10x1xf32>
    %126 = vector.broadcast %125 : vector<10x1xf32> to vector<10x32xf32>
    %127 = arith.subf %117, %126 : vector<10x32xf32>
    %128 = arith.mulf %127, %127 : vector<10x32xf32>
    %cst_72 = arith.constant dense<0.000000e+00> : vector<10xf32>
    %129 = vector.multi_reduction <add>, %128, %cst_72 [1] : vector<10x32xf32> to vector<10xf32>
    %130 = vector.shape_cast %129 : vector<10xf32> to vector<10x1xf32>
    %cst_73 = arith.constant 3.200000e+01 : f32
    %131 = vector.broadcast %cst_73 : f32 to vector<10x1xf32>
    %132 = arith.divf %130, %131 : vector<10x1xf32>
    %133 = vector.broadcast %125 : vector<10x1xf32> to vector<10x32xf32>
    %134 = arith.subf %117, %133 : vector<10x32xf32>
    %cst_74 = arith.constant 9.99999974E-6 : f32
    %135 = vector.broadcast %cst_74 : f32 to vector<10x1xf32>
    %136 = arith.addf %132, %135 : vector<10x1xf32>
    %137 = math.rsqrt %136 : vector<10x1xf32>
    %138 = vector.broadcast %137 : vector<10x1xf32> to vector<10x32xf32>
    %139 = arith.mulf %134, %138 : vector<10x32xf32>
    %140 = vector.broadcast %119 : vector<1x32xf32> to vector<10x32xf32>
    %141 = arith.mulf %139, %140 : vector<10x32xf32>
    %142 = vector.broadcast %121 : vector<1x32xf32> to vector<10x32xf32>
    %143 = arith.addf %141, %142 : vector<10x32xf32>
    %144 = vector.shape_cast %143 : vector<10x32xf32> to vector<1x10x32xf32>
    %145 = vector.broadcast %144 : vector<1x10x32xf32> to vector<4x10x32xf32>
    %c1_75 = arith.constant 1 : index
    %c0_76 = arith.constant 0 : index
    %c0_77 = arith.constant 0 : index
    %c0_78 = arith.constant 0 : index
    %146 = vector.load %arg7[%c1_75, %c0_76, %c0_77, %c0_78] : memref<2x4x32x24xf32, #tpu.memory_space<vmem>>, vector<1x4x32x24xf32>
    %147 = vector.shape_cast %146 : vector<1x4x32x24xf32> to vector<4x32x24xf32>
    "tpu.trace_start"() <{level = 10 : i32, message = "hnd,hde->hne"}> : () -> ()
    %cst_79 = arith.constant dense<0.000000e+00> : vector<4x10x24xf32>
    %148 = tpu.matmul %145, %147, %cst_79 {dimension_numbers = #tpu.dot_dimension_numbers<[2], [1], [1], [2], [0, 0, 0, 1, 1, 2], [0], [0]>} : vector<4x10x32xf32>, vector<4x32x24xf32>, vector<4x10x24xf32> -> vector<4x10x24xf32>
    "tpu.trace_stop"() : () -> ()
    %149 = vector.extract_strided_slice %148 {offsets = [0, 0, 0], sizes = [4, 10, 8], strides = [1, 1, 1]} : vector<4x10x24xf32> to vector<4x10x8xf32>
    %150 = vector.extract_strided_slice %148 {offsets = [0, 0, 8], sizes = [4, 10, 8], strides = [1, 1, 1]} : vector<4x10x24xf32> to vector<4x10x8xf32>
    %151 = vector.extract_strided_slice %148 {offsets = [0, 0, 16], sizes = [4, 10, 8], strides = [1, 1, 1]} : vector<4x10x24xf32> to vector<4x10x8xf32>
    "tpu.trace_start"() <{level = 10 : i32, message = "hqd,hkd->hqk"}> : () -> ()
    %cst_80 = arith.constant dense<0.000000e+00> : vector<4x10x10xf32>
    %152 = tpu.matmul %149, %150, %cst_80 {dimension_numbers = #tpu.dot_dimension_numbers<[2], [2], [1], [1], [0, 0, 0, 1, 1, 1], [0], [0]>} : vector<4x10x8xf32>, vector<4x10x8xf32>, vector<4x10x10xf32> -> vector<4x10x10xf32>
    "tpu.trace_stop"() : () -> ()
    %153 = vector.shape_cast %5 : vector<10x10xf32> to vector<1x10x10xf32>
    %154 = vector.broadcast %153 : vector<1x10x10xf32> to vector<4x10x10xf32>
    %155 = arith.addf %152, %154 : vector<4x10x10xf32>
    %cst_81 = arith.constant dense<0xFF800000> : vector<4x10xf32>
    %156 = vector.multi_reduction <maximumf>, %155, %cst_81 [2] : vector<4x10x10xf32> to vector<4x10xf32>
    %157 = vector.shape_cast %156 : vector<4x10xf32> to vector<4x10x1xf32>
    %158 = vector.broadcast %157 : vector<4x10x1xf32> to vector<4x10x10xf32>
    %159 = arith.subf %155, %158 : vector<4x10x10xf32>
    %160 = math.exp %159 : vector<4x10x10xf32>
    %cst_82 = arith.constant dense<0.000000e+00> : vector<4x10xf32>
    %161 = vector.multi_reduction <add>, %160, %cst_82 [2] : vector<4x10x10xf32> to vector<4x10xf32>
    %162 = vector.shape_cast %161 : vector<4x10xf32> to vector<4x10x1xf32>
    %163 = tpu.reciprocal %162 {approx = true} : vector<4x10x1xf32> -> vector<4x10x1xf32>
    %164 = vector.broadcast %163 : vector<4x10x1xf32> to vector<4x10x10xf32>
    %165 = arith.mulf %160, %164 : vector<4x10x10xf32>
    "tpu.trace_start"() <{level = 10 : i32, message = "hqk,hkd->hqd"}> : () -> ()
    %cst_83 = arith.constant dense<0.000000e+00> : vector<4x10x8xf32>
    %166 = tpu.matmul %165, %151, %cst_83 {dimension_numbers = #tpu.dot_dimension_numbers<[2], [1], [1], [2], [0, 0, 0, 1, 1, 2], [0], [0]>} : vector<4x10x10xf32>, vector<4x10x8xf32>, vector<4x10x8xf32> -> vector<4x10x8xf32>
    "tpu.trace_stop"() : () -> ()
    %c1_84 = arith.constant 1 : index
    %c0_85 = arith.constant 0 : index
    %c0_86 = arith.constant 0 : index
    %c0_87 = arith.constant 0 : index
    %167 = vector.load %arg8[%c1_84, %c0_85, %c0_86, %c0_87] : memref<2x4x8x32xf32, #tpu.memory_space<vmem>>, vector<1x4x8x32xf32>
    %168 = vector.shape_cast %167 : vector<1x4x8x32xf32> to vector<4x8x32xf32>
    "tpu.trace_start"() <{level = 10 : i32, message = "hqd,hde->hqe"}> : () -> ()
    %cst_88 = arith.constant dense<0.000000e+00> : vector<4x10x32xf32>
    %169 = tpu.matmul %166, %168, %cst_88 {dimension_numbers = #tpu.dot_dimension_numbers<[2], [1], [1], [2], [0, 0, 0, 1, 1, 2], [0], [0]>} : vector<4x10x8xf32>, vector<4x8x32xf32>, vector<4x10x32xf32> -> vector<4x10x32xf32>
    "tpu.trace_stop"() : () -> ()
    %cst_89 = arith.constant dense<0.000000e+00> : vector<10x32xf32>
    %170 = vector.multi_reduction <add>, %169, %cst_89 [0] : vector<4x10x32xf32> to vector<10x32xf32>
    %171 = arith.addf %117, %170 : vector<10x32xf32>
    %c1_90 = arith.constant 1 : index
    %c0_91 = arith.constant 0 : index
    %c0_92 = arith.constant 0 : index
    %172 = vector.load %arg9[%c1_90, %c0_91, %c0_92] : memref<2x1x32xf32, #tpu.memory_space<vmem>>, vector<1x1x32xf32>
    %173 = vector.shape_cast %172 : vector<1x1x32xf32> to vector<1x32xf32>
    %174 = vector.broadcast %173 : vector<1x32xf32> to vector<10x32xf32>
    %175 = arith.addf %171, %174 : vector<10x32xf32>
    %c1_93 = arith.constant 1 : index
    %c0_94 = arith.constant 0 : index
    %c0_95 = arith.constant 0 : index
    %176 = vector.load %arg10[%c1_93, %c0_94, %c0_95] : memref<2x1x32xf32, #tpu.memory_space<vmem>>, vector<1x1x32xf32>
    %177 = vector.shape_cast %176 : vector<1x1x32xf32> to vector<1x32xf32>
    %c1_96 = arith.constant 1 : index
    %c0_97 = arith.constant 0 : index
    %c0_98 = arith.constant 0 : index
    %178 = vector.load %arg11[%c1_96, %c0_97, %c0_98] : memref<2x1x32xf32, #tpu.memory_space<vmem>>, vector<1x1x32xf32>
    %179 = vector.shape_cast %178 : vector<1x1x32xf32> to vector<1x32xf32>
    %cst_99 = arith.constant dense<0.000000e+00> : vector<10xf32>
    %180 = vector.multi_reduction <add>, %175, %cst_99 [1] : vector<10x32xf32> to vector<10xf32>
    %181 = vector.shape_cast %180 : vector<10xf32> to vector<10x1xf32>
    %cst_100 = arith.constant 3.200000e+01 : f32
    %182 = vector.broadcast %cst_100 : f32 to vector<10x1xf32>
    %183 = arith.divf %181, %182 : vector<10x1xf32>
    %184 = vector.broadcast %183 : vector<10x1xf32> to vector<10x32xf32>
    %185 = arith.subf %175, %184 : vector<10x32xf32>
    %186 = arith.mulf %185, %185 : vector<10x32xf32>
    %cst_101 = arith.constant dense<0.000000e+00> : vector<10xf32>
    %187 = vector.multi_reduction <add>, %186, %cst_101 [1] : vector<10x32xf32> to vector<10xf32>
    %188 = vector.shape_cast %187 : vector<10xf32> to vector<10x1xf32>
    %cst_102 = arith.constant 3.200000e+01 : f32
    %189 = vector.broadcast %cst_102 : f32 to vector<10x1xf32>
    %190 = arith.divf %188, %189 : vector<10x1xf32>
    %191 = vector.broadcast %183 : vector<10x1xf32> to vector<10x32xf32>
    %192 = arith.subf %175, %191 : vector<10x32xf32>
    %cst_103 = arith.constant 9.99999974E-6 : f32
    %193 = vector.broadcast %cst_103 : f32 to vector<10x1xf32>
    %194 = arith.addf %190, %193 : vector<10x1xf32>
    %195 = math.rsqrt %194 : vector<10x1xf32>
    %196 = vector.broadcast %195 : vector<10x1xf32> to vector<10x32xf32>
    %197 = arith.mulf %192, %196 : vector<10x32xf32>
    %198 = vector.broadcast %177 : vector<1x32xf32> to vector<10x32xf32>
    %199 = arith.mulf %197, %198 : vector<10x32xf32>
    %200 = vector.broadcast %179 : vector<1x32xf32> to vector<10x32xf32>
    %201 = arith.addf %199, %200 : vector<10x32xf32>
    %c1_104 = arith.constant 1 : index
    %c0_105 = arith.constant 0 : index
    %c0_106 = arith.constant 0 : index
    %202 = vector.load %arg12[%c1_104, %c0_105, %c0_106] : memref<2x32x64xf32, #tpu.memory_space<vmem>>, vector<1x32x64xf32>
    %203 = vector.shape_cast %202 : vector<1x32x64xf32> to vector<32x64xf32>
    %cst_107 = arith.constant dense<0.000000e+00> : vector<10x64xf32>
    %204 = tpu.matmul %201, %203, %cst_107 {dimension_numbers = #tpu.dot_dimension_numbers<[1], [0], [0], [1], [0, 0, 1, 1], [], []>} : vector<10x32xf32>, vector<32x64xf32>, vector<10x64xf32> -> vector<10x64xf32>
    %c1_108 = arith.constant 1 : index
    %c0_109 = arith.constant 0 : index
    %c0_110 = arith.constant 0 : index
    %205 = vector.load %arg13[%c1_108, %c0_109, %c0_110] : memref<2x1x64xf32, #tpu.memory_space<vmem>>, vector<1x1x64xf32>
    %206 = vector.shape_cast %205 : vector<1x1x64xf32> to vector<1x64xf32>
    %207 = vector.broadcast %206 : vector<1x64xf32> to vector<10x64xf32>
    %208 = arith.addf %204, %207 : vector<10x64xf32>
    %209 = arith.mulf %208, %208 : vector<10x64xf32>
    %210 = arith.mulf %208, %209 : vector<10x64xf32>
    %cst_111 = arith.constant 4.471500e-02 : f32
    %211 = vector.broadcast %cst_111 : f32 to vector<10x64xf32>
    %212 = arith.mulf %211, %210 : vector<10x64xf32>
    %213 = arith.addf %208, %212 : vector<10x64xf32>
    %cst_112 = arith.constant 0.797884583 : f32
    %214 = vector.broadcast %cst_112 : f32 to vector<10x64xf32>
    %215 = arith.mulf %214, %213 : vector<10x64xf32>
    %216 = math.tanh %215 : vector<10x64xf32>
    %cst_113 = arith.constant 1.000000e+00 : f32
    %217 = vector.broadcast %cst_113 : f32 to vector<10x64xf32>
    %218 = arith.addf %217, %216 : vector<10x64xf32>
    %cst_114 = arith.constant 5.000000e-01 : f32
    %219 = vector.broadcast %cst_114 : f32 to vector<10x64xf32>
    %220 = arith.mulf %219, %218 : vector<10x64xf32>
    %221 = arith.mulf %208, %220 : vector<10x64xf32>
    %c1_115 = arith.constant 1 : index
    %c0_116 = arith.constant 0 : index
    %c0_117 = arith.constant 0 : index
    %222 = vector.load %arg14[%c1_115, %c0_116, %c0_117] : memref<2x64x32xf32, #tpu.memory_space<vmem>>, vector<1x64x32xf32>
    %223 = vector.shape_cast %222 : vector<1x64x32xf32> to vector<64x32xf32>
    %cst_118 = arith.constant dense<0.000000e+00> : vector<10x32xf32>
    %224 = tpu.matmul %221, %223, %cst_118 {dimension_numbers = #tpu.dot_dimension_numbers<[1], [0], [0], [1], [0, 0, 1, 1], [], []>} : vector<10x64xf32>, vector<64x32xf32>, vector<10x32xf32> -> vector<10x32xf32>
    %c1_119 = arith.constant 1 : index
    %c0_120 = arith.constant 0 : index
    %c0_121 = arith.constant 0 : index
    %225 = vector.load %arg15[%c1_119, %c0_120, %c0_121] : memref<2x1x32xf32, #tpu.memory_space<vmem>>, vector<1x1x32xf32>
    %226 = vector.shape_cast %225 : vector<1x1x32xf32> to vector<1x32xf32>
    %227 = vector.broadcast %226 : vector<1x32xf32> to vector<10x32xf32>
    %228 = arith.addf %224, %227 : vector<10x32xf32>
    %229 = arith.addf %175, %228 : vector<10x32xf32>
    %c0_122 = arith.constant 0 : index
    %c0_123 = arith.constant 0 : index
    %230 = vector.load %arg3[%c0_122, %c0_123] : memref<2x10xf32, #tpu.memory_space<vmem>>, vector<2x10xf32>
    %cst_124 = arith.constant dense<0.000000e+00> : vector<2x32xf32>
    %231 = tpu.matmul %230, %229, %cst_124 {dimension_numbers = #tpu.dot_dimension_numbers<[1], [0], [0], [1], [0, 0, 1, 1], [], []>} : vector<2x10xf32>, vector<10x32xf32>, vector<2x32xf32> -> vector<2x32xf32>
    %c0_125 = arith.constant 0 : index
    %c0_126 = arith.constant 0 : index
    %232 = vector.load %arg16[%c0_125, %c0_126] : memref<1x32xf32, #tpu.memory_space<vmem>>, vector<1x32xf32>
    %c0_127 = arith.constant 0 : index
    %c0_128 = arith.constant 0 : index
    %233 = vector.load %arg17[%c0_127, %c0_128] : memref<1x32xf32, #tpu.memory_space<vmem>>, vector<1x32xf32>
    %cst_129 = arith.constant dense<0.000000e+00> : vector<2xf32>
    %234 = vector.multi_reduction <add>, %231, %cst_129 [1] : vector<2x32xf32> to vector<2xf32>
    %235 = vector.shape_cast %234 : vector<2xf32> to vector<2x1xf32>
    %cst_130 = arith.constant 3.200000e+01 : f32
    %236 = vector.broadcast %cst_130 : f32 to vector<2x1xf32>
    %237 = arith.divf %235, %236 : vector<2x1xf32>
    %238 = vector.broadcast %237 : vector<2x1xf32> to vector<2x32xf32>
    %239 = arith.subf %231, %238 : vector<2x32xf32>
    %240 = arith.mulf %239, %239 : vector<2x32xf32>
    %cst_131 = arith.constant dense<0.000000e+00> : vector<2xf32>
    %241 = vector.multi_reduction <add>, %240, %cst_131 [1] : vector<2x32xf32> to vector<2xf32>
    %242 = vector.shape_cast %241 : vector<2xf32> to vector<2x1xf32>
    %cst_132 = arith.constant 3.200000e+01 : f32
    %243 = vector.broadcast %cst_132 : f32 to vector<2x1xf32>
    %244 = arith.divf %242, %243 : vector<2x1xf32>
    %245 = vector.broadcast %237 : vector<2x1xf32> to vector<2x32xf32>
    %246 = arith.subf %231, %245 : vector<2x32xf32>
    %cst_133 = arith.constant 9.99999974E-6 : f32
    %247 = vector.broadcast %cst_133 : f32 to vector<2x1xf32>
    %248 = arith.addf %244, %247 : vector<2x1xf32>
    %249 = math.rsqrt %248 : vector<2x1xf32>
    %250 = vector.broadcast %249 : vector<2x1xf32> to vector<2x32xf32>
    %251 = arith.mulf %246, %250 : vector<2x32xf32>
    %252 = vector.broadcast %232 : vector<1x32xf32> to vector<2x32xf32>
    %253 = arith.mulf %251, %252 : vector<2x32xf32>
    %254 = vector.broadcast %233 : vector<1x32xf32> to vector<2x32xf32>
    %255 = arith.addf %253, %254 : vector<2x32xf32>
    %c0_134 = arith.constant 0 : index
    %c0_135 = arith.constant 0 : index
    %256 = vector.load %arg18[%c0_134, %c0_135] : memref<32x128xf32, #tpu.memory_space<vmem>>, vector<32x128xf32>
    %cst_136 = arith.constant dense<0.000000e+00> : vector<2x128xf32>
    %257 = tpu.matmul %255, %256, %cst_136 {dimension_numbers = #tpu.dot_dimension_numbers<[1], [0], [0], [1], [0, 0, 1, 1], [], []>} : vector<2x32xf32>, vector<32x128xf32>, vector<2x128xf32> -> vector<2x128xf32>
    %c0_137 = arith.constant 0 : index
    %c0_138 = arith.constant 0 : index
    %258 = vector.load %arg19[%c0_137, %c0_138] : memref<1x128xf32, #tpu.memory_space<vmem>>, vector<1x128xf32>
    %259 = vector.broadcast %258 : vector<1x128xf32> to vector<2x128xf32>
    %260 = arith.addf %257, %259 : vector<2x128xf32>
    %c0_139 = arith.constant 0 : index
    %c0_140 = arith.constant 0 : index
    %261 = vector.load %arg20[%c0_139, %c0_140] : memref<2x128xf32, #tpu.memory_space<vmem>>, vector<2x128xf32>
    tpu.vector_store %arg20[%c0_139, %c0_140], %260 {strides = array<i32>} : memref<2x128xf32, #tpu.memory_space<vmem>>, vector<2x128xf32>,
    return
  }
}

</mosaic_0001>

<llo_original>
// kernel: tpu_custom_call.1
$region0: #{tpu_custom_call.1}
  #allocation0 [shape = 'u32[]', space=smem, size = 0x4, offset = 0x4, fixed_abs, tag = 'smem constant byte address 0x4 - core index']
  #allocation1 [shape = 'u32[72,128]{1,0:T(1,128)}', space=vmem, size = 0x9000, scoped, tag = 'internal scratch']
  %s0 = inlined_call_operand.vmem [shape: f32[10,256], index: 0, kind: input, shape index: {}]
  %s1 = inlined_call_operand.vmem [shape: f32[10,32], index: 1, kind: input, shape index: {}]
  %s2 = inlined_call_operand.vmem [shape: f32[10,10], index: 2, kind: input, shape index: {}]
  %s3 = inlined_call_operand.vmem [shape: f32[2,10], index: 3, kind: input, shape index: {}]
  %s4 = inlined_call_operand.vmem [shape: f32[256,32], index: 4, kind: input, shape index: {}]
  %s5 = inlined_call_operand.vmem [shape: f32[2,1,32], index: 5, kind: input, shape index: {}]
  %s6 = inlined_call_operand.vmem [shape: f32[2,1,32], index: 6, kind: input, shape index: {}]
  %s7 = inlined_call_operand.vmem [shape: f32[2,4,32,24], index: 7, kind: input, shape index: {}]
  %s8 = inlined_call_operand.vmem [shape: f32[2,4,8,32], index: 8, kind: input, shape index: {}]
  %s9 = inlined_call_operand.vmem [shape: f32[2,1,32], index: 9, kind: input, shape index: {}]
  %s10 = inlined_call_operand.vmem [shape: f32[2,1,32], index: 10, kind: input, shape index: {}]
  %s11 = inlined_call_operand.vmem [shape: f32[2,1,32], index: 11, kind: input, shape index: {}]
  %s12 = inlined_call_operand.vmem [shape: f32[2,32,64], index: 12, kind: input, shape index: {}]
  %s13 = inlined_call_operand.vmem [shape: f32[2,1,64], index: 13, kind: input, shape index: {}]
  %s14 = inlined_call_operand.vmem [shape: f32[2,64,32], index: 14, kind: input, shape index: {}]
  %s15 = inlined_call_operand.vmem [shape: f32[2,1,32], index: 15, kind: input, shape index: {}]
  %s16 = inlined_call_operand.vmem [shape: f32[1,32], index: 16, kind: input, shape index: {}]
  %s17 = inlined_call_operand.vmem [shape: f32[1,32], index: 17, kind: input, shape index: {}]
  %s18 = inlined_call_operand.vmem [shape: f32[32,128], index: 18, kind: input, shape index: {}]
  %s19 = inlined_call_operand.vmem [shape: f32[1,128], index: 19, kind: input, shape index: {}]
  %s20 = inlined_call_operand.hbm [shape: f32[2,128], index: 20, kind: output, shape index: {}]
  %s21 = sld [smem:[#allocation0]]
  $region90: #{tpu_custom_call.1} parent=0
    _
  %s23 = ssub.s32 1, %s21
  %s24 = scalar_select 0, %s23, %s21
  $region1: #{tpu_custom_call.1} parent=0
    #allocation2 [shape = 'u8[1024]{0}', space=vmem, size = 0x400, scoped, tag = 'output window, operand 0, single buffered']
    #allocation3 [shape = 's32[1]{0}', space=sflag, size = 0x4, scoped, tag = 'scoped memory for tpu_custom_call.1']
    %25 = vsyncpa [#allocation3], 0
    // Predicated region
    $region2: #{tpu_custom_call.1} parent=1 // pred_check
      _
    $region3: #{tpu_custom_call.1} parent=1 // pred_check_branch
      %27 = sbr.rel (0) target = $region5
    $region4: #{tpu_custom_call.1} parent=1 // pred_region
      _
    $region5: #{tpu_custom_call.1} parent=1 // pred_fallthru
      _
    // Predicated region
    $region6: #{tpu_custom_call.1} parent=1 // pred_check
      _
    $region7: #{tpu_custom_call.1} parent=1 // pred_check_branch
      %29 = sbr.rel (0) target = $region9
    $region8: #{tpu_custom_call.1} parent=1 // pred_region
      _
    $region9: #{tpu_custom_call.1} parent=1 // pred_fallthru
      _
    // Predicated region
    $region10: #{tpu_custom_call.1} parent=1 // pred_check
      _
    $region11: #{tpu_custom_call.1} parent=1 // pred_check_branch
      %31 = sbr.rel (0) target = $region13
    $region12: #{tpu_custom_call.1} parent=1 // pred_region
      _
    $region13: #{tpu_custom_call.1} parent=1 // pred_fallthru
      _
    // Predicated region
    $region14: #{tpu_custom_call.1} parent=1 // pred_check
      _
    $region15: #{tpu_custom_call.1} parent=1 // pred_check_branch
      %33 = sbr.rel (0) target = $region17
    $region16: #{tpu_custom_call.1} parent=1 // pred_region
      _
    $region17: #{tpu_custom_call.1} parent=1 // pred_fallthru
      _
    // Predicated region
    $region18: #{tpu_custom_call.1} parent=1 // pred_check
      _
    $region19: #{tpu_custom_call.1} parent=1 // pred_check_branch
      %35 = sbr.rel (0) target = $region21
    $region20: #{tpu_custom_call.1} parent=1 // pred_region
      _
    $region21: #{tpu_custom_call.1} parent=1 // pred_fallthru
      _
    // Predicated region
    $region22: #{tpu_custom_call.1} parent=1 // pred_check
      _
    $region23: #{tpu_custom_call.1} parent=1 // pred_check_branch
      %37 = sbr.rel (0) target = $region25
    $region24: #{tpu_custom_call.1} parent=1 // pred_region
      _
    $region25: #{tpu_custom_call.1} parent=1 // pred_fallthru
      _
    // Predicated region
    $region26: #{tpu_custom_call.1} parent=1 // pred_check
      _
    $region27: #{tpu_custom_call.1} parent=1 // pred_check_branch
      %39 = sbr.rel (0) target = $region29
    $region28: #{tpu_custom_call.1} parent=1 // pred_region
      _
    $region29: #{tpu_custom_call.1} parent=1 // pred_fallthru
      _
    // Predicated region
    $region30: #{tpu_custom_call.1} parent=1 // pred_check
      _
    $region31: #{tpu_custom_call.1} parent=1 // pred_check_branch
      %41 = sbr.rel (0) target = $region33
    $region32: #{tpu_custom_call.1} parent=1 // pred_region
      _
    $region33: #{tpu_custom_call.1} parent=1 // pred_fallthru
      _
    // Predicated region
    $region34: #{tpu_custom_call.1} parent=1 // pred_check
      _
    $region35: #{tpu_custom_call.1} parent=1 // pred_check_branch
      %43 = sbr.rel (0) target = $region37
    $region36: #{tpu_custom_call.1} parent=1 // pred_region
      _
    $region37: #{tpu_custom_call.1} parent=1 // pred_fallthru
      _
    // Predicated region
    $region38: #{tpu_custom_call.1} parent=1 // pred_check
      _
    $region39: #{tpu_custom_call.1} parent=1 // pred_check_branch
      %45 = sbr.rel (0) target = $region41
    $region40: #{tpu_custom_call.1} parent=1 // pred_region
      _
    $region41: #{tpu_custom_call.1} parent=1 // pred_fallthru
      _
    // Predicated region
    $region42: #{tpu_custom_call.1} parent=1 // pred_check
      _
    $region43: #{tpu_custom_call.1} parent=1 // pred_check_branch
      %47 = sbr.rel (0) target = $region45
    $region44: #{tpu_custom_call.1} parent=1 // pred_region
      _
    $region45: #{tpu_custom_call.1} parent=1 // pred_fallthru
      _
    // Predicated region
    $region46: #{tpu_custom_call.1} parent=1 // pred_check
      _
    $region47: #{tpu_custom_call.1} parent=1 // pred_check_branch
      %49 = sbr.rel (0) target = $region49
    $region48: #{tpu_custom_call.1} parent=1 // pred_region
      _
    $region49: #{tpu_custom_call.1} parent=1 // pred_fallthru
      _
    // Predicated region
    $region50: #{tpu_custom_call.1} parent=1 // pred_check
      _
    $region51: #{tpu_custom_call.1} parent=1 // pred_check_branch
      %51 = sbr.rel (0) target = $region53
    $region52: #{tpu_custom_call.1} parent=1 // pred_region
      _
    $region53: #{tpu_custom_call.1} parent=1 // pred_fallthru
      _
    // Predicated region
    $region54: #{tpu_custom_call.1} parent=1 // pred_check
      _
    $region55: #{tpu_custom_call.1} parent=1 // pred_check_branch
      %53 = sbr.rel (0) target = $region57
    $region56: #{tpu_custom_call.1} parent=1 // pred_region
      _
    $region57: #{tpu_custom_call.1} parent=1 // pred_fallthru
      _
    // Predicated region
    $region58: #{tpu_custom_call.1} parent=1 // pred_check
      _
    $region59: #{tpu_custom_call.1} parent=1 // pred_check_branch
      %55 = sbr.rel (0) target = $region61
    $region60: #{tpu_custom_call.1} parent=1 // pred_region
      _
    $region61: #{tpu_custom_call.1} parent=1 // pred_fallthru
      _
    // Predicated region
    $region62: #{tpu_custom_call.1} parent=1 // pred_check
      _
    $region63: #{tpu_custom_call.1} parent=1 // pred_check_branch
      %57 = sbr.rel (0) target = $region65
    $region64: #{tpu_custom_call.1} parent=1 // pred_region
      _
    $region65: #{tpu_custom_call.1} parent=1 // pred_fallthru
      _
    // Predicated region
    $region66: #{tpu_custom_call.1} parent=1 // pred_check
      _
    $region67: #{tpu_custom_call.1} parent=1 // pred_check_branch
      %59 = sbr.rel (0) target = $region69
    $region68: #{tpu_custom_call.1} parent=1 // pred_region
      _
    $region69: #{tpu_custom_call.1} parent=1 // pred_fallthru
      _
    // Predicated region
    $region70: #{tpu_custom_call.1} parent=1 // pred_check
      _
    $region71: #{tpu_custom_call.1} parent=1 // pred_check_branch
      %61 = sbr.rel (0) target = $region73
    $region72: #{tpu_custom_call.1} parent=1 // pred_region
      _
    $region73: #{tpu_custom_call.1} parent=1 // pred_fallthru
      _
    // Predicated region
    $region74: #{tpu_custom_call.1} parent=1 // pred_check
      _
    $region75: #{tpu_custom_call.1} parent=1 // pred_check_branch
      %63 = sbr.rel (0) target = $region77
    $region76: #{tpu_custom_call.1} parent=1 // pred_region
      _
    $region77: #{tpu_custom_call.1} parent=1 // pred_fallthru
      _
    // Predicated region
    $region78: #{tpu_custom_call.1} parent=1 // pred_check
      _
    $region79: #{tpu_custom_call.1} parent=1 // pred_check_branch
      %65 = sbr.rel (0) target = $region81
    $region80: #{tpu_custom_call.1} parent=1 // pred_region
      _
    $region81: #{tpu_custom_call.1} parent=1 // pred_fallthru
      _
    %v66 = vld [vmem:[%s0] sm:$0xff]
    %v67 = vld [vmem:[%s0 + $0x8] sm:$0xff]
    %v68 = vld [vmem:[%s0 + $0x10] sm:$0x3]
    %v69 = vld [vmem:[%s0 + $0x18] sm:$0x3]
    %v70 = vld [vmem:[%s4] sm:$0xff]
    %v71 = vld [vmem:[%s4 + $0x8] sm:$0xff]
    %v72 = vld [vmem:[%s4 + $0x10] sm:$0xff]
    %v73 = vld [vmem:[%s4 + $0x18] sm:$0xff]
    %v74 = vld [vmem:[%s4 + $0x20] sm:$0xff]
    %v75 = vld [vmem:[%s4 + $0x28] sm:$0xff]
    %v76 = vld [vmem:[%s4 + $0x30] sm:$0xff]
    %v77 = vld [vmem:[%s4 + $0x38] sm:$0xff]
    %v78 = vld [vmem:[%s4 + $0x40] sm:$0xff]
    %v79 = vld [vmem:[%s4 + $0x48] sm:$0xff]
    %v80 = vld [vmem:[%s4 + $0x50] sm:$0xff]
    %v81 = vld [vmem:[%s4 + $0x58] sm:$0xff]
    %v82 = vld [vmem:[%s4 + $0x60] sm:$0xff]
    %v83 = vld [vmem:[%s4 + $0x68] sm:$0xff]
    %v84 = vld [vmem:[%s4 + $0x70] sm:$0xff]
    %v85 = vld [vmem:[%s4 + $0x78] sm:$0xff]
    %v86 = vld [vmem:[%s4 + $0x80] sm:$0xff]
    %v87 = vld [vmem:[%s4 + $0x88] sm:$0xff]
    %v88 = vld [vmem:[%s4 + $0x90] sm:$0xff]
    %v89 = vld [vmem:[%s4 + $0x98] sm:$0xff]
    %v90 = vld [vmem:[%s4 + $0xa0] sm:$0xff]
    %v91 = vld [vmem:[%s4 + $0xa8] sm:$0xff]
    %v92 = vld [vmem:[%s4 + $0xb0] sm:$0xff]
    %v93 = vld [vmem:[%s4 + $0xb8] sm:$0xff]
    %v94 = vld [vmem:[%s4 + $0xc0] sm:$0xff]
    %v95 = vld [vmem:[%s4 + $0xc8] sm:$0xff]
    %v96 = vld [vmem:[%s4 + $0xd0] sm:$0xff]
    %v97 = vld [vmem:[%s4 + $0xd8] sm:$0xff]
    %v98 = vld [vmem:[%s4 + $0xe0] sm:$0xff]
    %v99 = vld [vmem:[%s4 + $0xe8] sm:$0xff]
    %v100 = vld [vmem:[%s4 + $0xf0] sm:$0xff]
    %v101 = vld [vmem:[%s4 + $0xf8] sm:$0xff]
    %v102 = vld [vmem:[%s1] sm:$0xff]
    %v103 = vld [vmem:[%s1 + $0x8] sm:$0x3]
    %104 = vmatpush.msra.mxu0 %v85
    %105 = vmatpush.msra.mxu0 %v84
    %106 = vmatpush.msra.mxu0 %v83
    %107 = vmatpush.msra.mxu0 %v82
    %108 = vmatpush.msra.mxu0 %v81
    %109 = vmatpush.msra.mxu0 %v80
    %110 = vmatpush.msra.mxu0 %v79
    %111 = vmatpush.msra.mxu0 %v78
    %112 = vmatpush.msra.mxu0 %v77
    %113 = vmatpush.msra.mxu0 %v76
    %114 = vmatpush.msra.mxu0 %v75
    %115 = vmatpush.msra.mxu0 %v74
    %116 = vmatpush.msra.mxu0 %v73
    %117 = vmatpush.msra.mxu0 %v72
    %118 = vmatpush.msra.mxu0 %v71
    %119 = vmatpush.msra.mxu0 %v70
    %120 = vmatmul.f32.gmra.mxu0 %v66
    %v121 = vpop.f32.mrf.mxu0
    %v122 = vadd.f32 %v102, %v121
    %123 = vmatmul.f32.gmra.mxu0 %v68
    %v124 = vpop.f32.mrf.mxu0
    %v125 = vadd.f32 %v103, %v124
    %126 = vdwg.mxu0
    %127 = vmatpush.msra.mxu0 %v101
    %128 = vmatpush.msra.mxu0 %v100
    %129 = vmatpush.msra.mxu0 %v99
    %130 = vmatpush.msra.mxu0 %v98
    %131 = vmatpush.msra.mxu0 %v97
    %132 = vmatpush.msra.mxu0 %v96
    %133 = vmatpush.msra.mxu0 %v95
    %134 = vmatpush.msra.mxu0 %v94
    %135 = vmatpush.msra.mxu0 %v93
    %136 = vmatpush.msra.mxu0 %v92
    %137 = vmatpush.msra.mxu0 %v91
    %138 = vmatpush.msra.mxu0 %v90
    %139 = vmatpush.msra.mxu0 %v89
    %140 = vmatpush.msra.mxu0 %v88
    %141 = vmatpush.msra.mxu0 %v87
    %142 = vmatpush.msra.mxu0 %v86
    %143 = vmatmul.f32.gmra.mxu0 %v67
    %v144 = vpop.f32.mrf.mxu0
    %v145 = vadd.f32 %v122, %v144
    %146 = vmatmul.f32.gmra.mxu0 %v69
    %v147 = vpop.f32.mrf.mxu0
    %v148 = vadd.f32 %v125, %v147
    %149 = vdwg.mxu0
    %v150 = vld [vmem:[%s2] sm:$0xff]
    %v151 = vld [vmem:[%s2 + $0x8] sm:$0x3]
    %v152 = vld [vmem:[%s5] sm:$0x1]
    %v153 = vld [vmem:[%s6] sm:$0x1]
    %vm154 = vcmask 261120
    %v155 = vsel %vm154, %v145, 0.0
    %156 = vadd.xlane.f32.xlu0 %v155
    %v157 = vpop.xlane.xlu0 %156
    %vm158 = vcmask 254976
    %v159 = vsel %vm158, %v148, 0.0
    %160 = vadd.xlane.f32.xlu0 %v159
    %v161 = vpop.xlane.xlu0 %160
    %v162 = vrcp.pop 32.0
    %v163 = vmul.f32 32.0, %v162
    %v164 = vsub.f32 1.0, %v163
    %v165 = vmul.f32 %v162, %v164
    %v166 = vadd.f32 %v162, %v165
    %vm167 = vweird.f32 %v162
    %v168 = vsel %vm167, %v162, %v166
    %v169 = vmul.f32 %v157, %v168
    %v170 = vmul.f32 %v161, %v168
    %v171 = vsub.f32 %v145, %v169
    %v172 = vsub.f32 %v148, %v170
    %v173 = vmul.f32 %v171, %v171
    %v174 = vmul.f32 %v172, %v172
    %v175 = vsel %vm154, %v173, 0.0
    %176 = vadd.xlane.f32.xlu0 %v175
    %v177 = vpop.xlane.xlu0 %176
    %v178 = vsel %vm158, %v174, 0.0
    %179 = vadd.xlane.f32.xlu0 %v178
    %v180 = vpop.xlane.xlu0 %179
    %v181 = vmul.f32 %v177, %v168
    %v182 = vmul.f32 %v180, %v168
    %v183 = vadd.f32 %v181, 1e-05
    %v184 = vadd.f32 %v182, 1e-05
    %v185 = vrsqrt.pop %v183
    %v186 = vmul.f32 %v185, %v183
    %v187 = vmul.f32 %v186, %v185
    %v188 = vmul.f32 0.5, %v187
    %v189 = vsub.f32 1.5, %v188
    %v190 = vmul.f32 %v185, %v189
    %vm191 = vweird.f32 %v183
    %vm192 = vweird.f32 %v185
    %vm193 = vmor %vm191, %vm192
    %v194 = vsel %vm193, %v185, %v190
    %v195 = vrsqrt.pop %v184
    %v196 = vmul.f32 %v195, %v184
    %v197 = vmul.f32 %v196, %v195
    %v198 = vmul.f32 0.5, %v197
    %v199 = vsub.f32 1.5, %v198
    %v200 = vmul.f32 %v195, %v199
    %vm201 = vweird.f32 %v184
    %vm202 = vweird.f32 %v195
    %vm203 = vmor %vm201, %vm202
    %v204 = vsel %vm203, %v195, %v200
    %v205 = vmul.f32 %v171, %v194
    %v206 = vmul.f32 %v172, %v204
    %v208 = vperm.slane %v152, 0
    %v210 = vmul.f32 %v205, %v208
    %v211 = vmul.f32 %v206, %v208
    %v213 = vperm.slane %v153, 0
    %v215 = vadd.f32 %v210, %v213
    %v216 = vadd.f32 %v211, %v213
    %v217 = vld [vmem:[%s7] sm:$0xff]
    %v218 = vld [vmem:[%s7 + $0x8] sm:$0xff]
    %v219 = vld [vmem:[%s7 + $0x10] sm:$0xff]
    %v220 = vld [vmem:[%s7 + $0x18] sm:$0xff]
    %v221 = vld [vmem:[%s7 + $0x20] sm:$0xff]
    %v222 = vld [vmem:[%s7 + $0x28] sm:$0xff]
    %v223 = vld [vmem:[%s7 + $0x30] sm:$0xff]
    %v224 = vld [vmem:[%s7 + $0x38] sm:$0xff]
    %v225 = vld [vmem:[%s7 + $0x40] sm:$0xff]
    %v226 = vld [vmem:[%s7 + $0x48] sm:$0xff]
    %v227 = vld [vmem:[%s7 + $0x50] sm:$0xff]
    %v228 = vld [vmem:[%s7 + $0x58] sm:$0xff]
    %v229 = vld [vmem:[%s7 + $0x60] sm:$0xff]
    %v230 = vld [vmem:[%s7 + $0x68] sm:$0xff]
    %v231 = vld [vmem:[%s7 + $0x70] sm:$0xff]
    %v232 = vld [vmem:[%s7 + $0x78] sm:$0xff]
    %v234 = vsel %vm154, %v215, 0
    %v237 = vsel %vm154, %v216, 0
    %239 = vmatpush.msra.mxu0 0.0
    %240 = vmatpush.msra.mxu0 0.0
    %241 = vmatpush.msra.mxu0 0.0
    %242 = vmatpush.msra.mxu0 0.0
    %243 = vmatpush.msra.mxu0 0.0
    %244 = vmatpush.msra.mxu0 0.0
    %245 = vmatpush.msra.mxu0 0.0
    %246 = vmatpush.msra.mxu0 0.0
    %247 = vmatpush.msra.mxu0 0.0
    %248 = vmatpush.msra.mxu0 0.0
    %249 = vmatpush.msra.mxu0 0.0
    %250 = vmatpush.msra.mxu0 0.0
    %251 = vmatpush.msra.mxu0 %v220
    %252 = vmatpush.msra.mxu0 %v219
    %253 = vmatpush.msra.mxu0 %v218
    %254 = vmatpush.msra.mxu0 %v217
    %255 = vmatmul.f32.gmra.mxu0 %v234
    %v256 = vpop.f32.mrf.mxu0
    %v257 = vadd.f32 0.0, %v256
    %258 = vmatmul.f32.gmra.mxu0 %v237
    %v259 = vpop.f32.mrf.mxu0
    %v260 = vadd.f32 0.0, %v259
    %261 = vdwg.mxu0
    %262 = vmatpush.msra.mxu0 0.0
    %263 = vmatpush.msra.mxu0 0.0
    %264 = vmatpush.msra.mxu0 0.0
    %265 = vmatpush.msra.mxu0 0.0
    %266 = vmatpush.msra.mxu0 0.0
    %267 = vmatpush.msra.mxu0 0.0
    %268 = vmatpush.msra.mxu0 0.0
    %269 = vmatpush.msra.mxu0 0.0
    %270 = vmatpush.msra.mxu0 0.0
    %271 = vmatpush.msra.mxu0 0.0
    %272 = vmatpush.msra.mxu0 0.0
    %273 = vmatpush.msra.mxu0 0.0
    %274 = vmatpush.msra.mxu0 %v224
    %275 = vmatpush.msra.mxu0 %v223
    %276 = vmatpush.msra.mxu0 %v222
    %277 = vmatpush.msra.mxu0 %v221
    %278 = vmatmul.f32.gmra.mxu0 %v234
    %v279 = vpop.f32.mrf.mxu0
    %v280 = vadd.f32 0.0, %v279
    %281 = vmatmul.f32.gmra.mxu0 %v237
    %v282 = vpop.f32.mrf.mxu0
    %v283 = vadd.f32 0.0, %v282
    %284 = vdwg.mxu0
    %285 = vmatpush.msra.mxu0 0.0
    %286 = vmatpush.msra.mxu0 0.0
    %287 = vmatpush.msra.mxu0 0.0
    %288 = vmatpush.msra.mxu0 0.0
    %289 = vmatpush.msra.mxu0 0.0
    %290 = vmatpush.msra.mxu0 0.0
    %291 = vmatpush.msra.mxu0 0.0
    %292 = vmatpush.msra.mxu0 0.0
    %293 = vmatpush.msra.mxu0 0.0
    %294 = vmatpush.msra.mxu0 0.0
    %295 = vmatpush.msra.mxu0 0.0
    %296 = vmatpush.msra.mxu0 0.0
    %297 = vmatpush.msra.mxu0 %v228
    %298 = vmatpush.msra.mxu0 %v227
    %299 = vmatpush.msra.mxu0 %v226
    %300 = vmatpush.msra.mxu0 %v225
    %301 = vmatmul.f32.gmra.mxu0 %v234
    %v302 = vpop.f32.mrf.mxu0
    %v303 = vadd.f32 0.0, %v302
    %304 = vmatmul.f32.gmra.mxu0 %v237
    %v305 = vpop.f32.mrf.mxu0
    %v306 = vadd.f32 0.0, %v305
    %307 = vdwg.mxu0
    %308 = vmatpush.msra.mxu0 0.0
    %309 = vmatpush.msra.mxu0 0.0
    %310 = vmatpush.msra.mxu0 0.0
    %311 = vmatpush.msra.mxu0 0.0
    %312 = vmatpush.msra.mxu0 0.0
    %313 = vmatpush.msra.mxu0 0.0
    %314 = vmatpush.msra.mxu0 0.0
    %315 = vmatpush.msra.mxu0 0.0
    %316 = vmatpush.msra.mxu0 0.0
    %317 = vmatpush.msra.mxu0 0.0
    %318 = vmatpush.msra.mxu0 0.0
    %319 = vmatpush.msra.mxu0 0.0
    %320 = vmatpush.msra.mxu0 %v232
    %321 = vmatpush.msra.mxu0 %v231
    %322 = vmatpush.msra.mxu0 %v230
    %323 = vmatpush.msra.mxu0 %v229
    %324 = vmatmul.f32.gmra.mxu0 %v234
    %v325 = vpop.f32.mrf.mxu0
    %v326 = vadd.f32 0.0, %v325
    %327 = vmatmul.f32.gmra.mxu0 %v237
    %v328 = vpop.f32.mrf.mxu0
    %v329 = vadd.f32 0.0, %v328
    %330 = vdwg.mxu0
    %333 = vrot.lane.b32.xlu0 %v257, 120
    %v334 = vpop.permute.xlu0 %333
    %335 = vrot.lane.b32.xlu0 %v260, 120
    %v336 = vpop.permute.xlu0 %335
    %vm337 = vcmask 64512
    %v338 = vsel %vm337, %v257, 0
    %v340 = vsel %vm337, %v260, 0
    %v342 = vsel %vm337, %v334, 0
    %v344 = vsel %vm337, %v336, 0
    %346 = vmatpush.xpose.msra.mxu0 0.0
    %347 = vmatpush.xpose.msra.mxu0 0.0
    %348 = vmatpush.xpose.msra.mxu0 0.0
    %349 = vmatpush.xpose.msra.mxu0 0.0
    %350 = vmatpush.xpose.msra.mxu0 0.0
    %351 = vmatpush.xpose.msra.mxu0 0.0
    %352 = vmatpush.xpose.msra.mxu0 0.0
    %353 = vmatpush.xpose.msra.mxu0 0.0
    %354 = vmatpush.xpose.msra.mxu0 0.0
    %355 = vmatpush.xpose.msra.mxu0 0.0
    %356 = vmatpush.xpose.msra.mxu0 0.0
    %357 = vmatpush.xpose.msra.mxu0 0.0
    %358 = vmatpush.xpose.msra.mxu0 0.0
    %359 = vmatpush.xpose.msra.mxu0 0.0
    %360 = vmatpush.xpose.msra.mxu0 %v344
    %361 = vmatpush.xpose.msra.mxu0 %v342
    %362 = vmatmul.f32.gmra.mxu0 %v338
    %v363 = vpop.f32.mrf.mxu0
    %v364 = vadd.f32 %v150, %v363
    %365 = vmatmul.f32.gmra.mxu0 %v340
    %v366 = vpop.f32.mrf.mxu0
    %v367 = vadd.f32 %v151, %v366
    %368 = vdwg.mxu0
    %371 = vrot.lane.b32.xlu0 %v280, 120
    %v372 = vpop.permute.xlu0 %371
    %373 = vrot.lane.b32.xlu0 %v283, 120
    %v374 = vpop.permute.xlu0 %373
    %v375 = vsel %vm337, %v280, 0
    %v377 = vsel %vm337, %v283, 0
    %v379 = vsel %vm337, %v372, 0
    %v381 = vsel %vm337, %v374, 0
    %383 = vmatpush.xpose.msra.mxu0 0.0
    %384 = vmatpush.xpose.msra.mxu0 0.0
    %385 = vmatpush.xpose.msra.mxu0 0.0
    %386 = vmatpush.xpose.msra.mxu0 0.0
    %387 = vmatpush.xpose.msra.mxu0 0.0
    %388 = vmatpush.xpose.msra.mxu0 0.0
    %389 = vmatpush.xpose.msra.mxu0 0.0
    %390 = vmatpush.xpose.msra.mxu0 0.0
    %391 = vmatpush.xpose.msra.mxu0 0.0
    %392 = vmatpush.xpose.msra.mxu0 0.0
    %393 = vmatpush.xpose.msra.mxu0 0.0
    %394 = vmatpush.xpose.msra.mxu0 0.0
    %395 = vmatpush.xpose.msra.mxu0 0.0
    %396 = vmatpush.xpose.msra.mxu0 0.0
    %397 = vmatpush.xpose.msra.mxu0 %v381
    %398 = vmatpush.xpose.msra.mxu0 %v379
    %399 = vmatmul.f32.gmra.mxu0 %v375
    %v400 = vpop.f32.mrf.mxu0
    %v401 = vadd.f32 %v150, %v400
    %402 = vmatmul.f32.gmra.mxu0 %v377
    %v403 = vpop.f32.mrf.mxu0
    %v404 = vadd.f32 %v151, %v403
    %405 = vdwg.mxu0
    %408 = vrot.lane.b32.xlu0 %v303, 120
    %v409 = vpop.permute.xlu0 %408
    %410 = vrot.lane.b32.xlu0 %v306, 120
    %v411 = vpop.permute.xlu0 %410
    %v412 = vsel %vm337, %v303, 0
    %v414 = vsel %vm337, %v306, 0
    %v416 = vsel %vm337, %v409, 0
    %v418 = vsel %vm337, %v411, 0
    %420 = vmatpush.xpose.msra.mxu0 0.0
    %421 = vmatpush.xpose.msra.mxu0 0.0
    %422 = vmatpush.xpose.msra.mxu0 0.0
    %423 = vmatpush.xpose.msra.mxu0 0.0
    %424 = vmatpush.xpose.msra.mxu0 0.0
    %425 = vmatpush.xpose.msra.mxu0 0.0
    %426 = vmatpush.xpose.msra.mxu0 0.0
    %427 = vmatpush.xpose.msra.mxu0 0.0
    %428 = vmatpush.xpose.msra.mxu0 0.0
    %429 = vmatpush.xpose.msra.mxu0 0.0
    %430 = vmatpush.xpose.msra.mxu0 0.0
    %431 = vmatpush.xpose.msra.mxu0 0.0
    %432 = vmatpush.xpose.msra.mxu0 0.0
    %433 = vmatpush.xpose.msra.mxu0 0.0
    %434 = vmatpush.xpose.msra.mxu0 %v418
    %435 = vmatpush.xpose.msra.mxu0 %v416
    %436 = vmatmul.f32.gmra.mxu0 %v412
    %v437 = vpop.f32.mrf.mxu0
    %v438 = vadd.f32 %v150, %v437
    %439 = vmatmul.f32.gmra.mxu0 %v414
    %v440 = vpop.f32.mrf.mxu0
    %v441 = vadd.f32 %v151, %v440
    %442 = vdwg.mxu0
    %445 = vrot.lane.b32.xlu0 %v326, 120
    %v446 = vpop.permute.xlu0 %445
    %447 = vrot.lane.b32.xlu0 %v329, 120
    %v448 = vpop.permute.xlu0 %447
    %v449 = vsel %vm337, %v326, 0
    %v451 = vsel %vm337, %v329, 0
    %v453 = vsel %vm337, %v446, 0
    %v455 = vsel %vm337, %v448, 0
    %457 = vmatpush.xpose.msra.mxu0 0.0
    %458 = vmatpush.xpose.msra.mxu0 0.0
    %459 = vmatpush.xpose.msra.mxu0 0.0
    %460 = vmatpush.xpose.msra.mxu0 0.0
    %461 = vmatpush.xpose.msra.mxu0 0.0
    %462 = vmatpush.xpose.msra.mxu0 0.0
    %463 = vmatpush.xpose.msra.mxu0 0.0
    %464 = vmatpush.xpose.msra.mxu0 0.0
    %465 = vmatpush.xpose.msra.mxu0 0.0
    %466 = vmatpush.xpose.msra.mxu0 0.0
    %467 = vmatpush.xpose.msra.mxu0 0.0
    %468 = vmatpush.xpose.msra.mxu0 0.0
    %469 = vmatpush.xpose.msra.mxu0 0.0
    %470 = vmatpush.xpose.msra.mxu0 0.0
    %471 = vmatpush.xpose.msra.mxu0 %v455
    %472 = vmatpush.xpose.msra.mxu0 %v453
    %473 = vmatmul.f32.gmra.mxu0 %v449
    %v474 = vpop.f32.mrf.mxu0
    %v475 = vadd.f32 %v150, %v474
    %476 = vmatmul.f32.gmra.mxu0 %v451
    %v477 = vpop.f32.mrf.mxu0
    %v478 = vadd.f32 %v151, %v477
    %479 = vdwg.mxu0
    %vm480 = vcmask 80896
    %v481 = vsel %vm480, %v364, -inf
    %482 = vmax.xlane.f32.xlu0 %v481
    %v483 = vpop.xlane.xlu0 %482
    %vm484 = vcmask 74752
    %v485 = vsel %vm484, %v367, -inf
    %486 = vmax.xlane.f32.xlu0 %v485
    %v487 = vpop.xlane.xlu0 %486
    %v488 = vsel %vm480, %v401, -inf
    %489 = vmax.xlane.f32.xlu0 %v488
    %v490 = vpop.xlane.xlu0 %489
    %v491 = vsel %vm484, %v404, -inf
    %492 = vmax.xlane.f32.xlu0 %v491
    %v493 = vpop.xlane.xlu0 %492
    %v494 = vsel %vm480, %v438, -inf
    %495 = vmax.xlane.f32.xlu0 %v494
    %v496 = vpop.xlane.xlu0 %495
    %v497 = vsel %vm484, %v441, -inf
    %498 = vmax.xlane.f32.xlu0 %v497
    %v499 = vpop.xlane.xlu0 %498
    %v500 = vsel %vm480, %v475, -inf
    %501 = vmax.xlane.f32.xlu0 %v500
    %v502 = vpop.xlane.xlu0 %501
    %v503 = vsel %vm484, %v478, -inf
    %504 = vmax.xlane.f32.xlu0 %v503
    %v505 = vpop.xlane.xlu0 %504
    %v506 = vsub.f32 %v364, %v483
    %v507 = vsub.f32 %v367, %v487
    %v508 = vsub.f32 %v401, %v490
    %v509 = vsub.f32 %v404, %v493
    %v510 = vsub.f32 %v438, %v496
    %v511 = vsub.f32 %v441, %v499
    %v512 = vsub.f32 %v475, %v502
    %v513 = vsub.f32 %v478, %v505
    %v514 = vmul.f32 %v506, 1.442695
    %v515 = vpow.pop %v514
    %v516 = vmul.f32 %v507, 1.442695
    %v517 = vpow.pop %v516
    %v518 = vmul.f32 %v508, 1.442695
    %v519 = vpow.pop %v518
    %v520 = vmul.f32 %v509, 1.442695
    %v521 = vpow.pop %v520
    %v522 = vmul.f32 %v510, 1.442695
    %v523 = vpow.pop %v522
    %v524 = vmul.f32 %v511, 1.442695
    %v525 = vpow.pop %v524
    %v526 = vmul.f32 %v512, 1.442695
    %v527 = vpow.pop %v526
    %v528 = vmul.f32 %v513, 1.442695
    %v529 = vpow.pop %v528
    %v530 = vsel %vm480, %v515, 0.0
    %531 = vadd.xlane.f32.xlu0 %v530
    %v532 = vpop.xlane.xlu0 %531
    %v533 = vsel %vm484, %v517, 0.0
    %534 = vadd.xlane.f32.xlu0 %v533
    %v535 = vpop.xlane.xlu0 %534
    %v536 = vsel %vm480, %v519, 0.0
    %537 = vadd.xlane.f32.xlu0 %v536
    %v538 = vpop.xlane.xlu0 %537
    %v539 = vsel %vm484, %v521, 0.0
    %540 = vadd.xlane.f32.xlu0 %v539
    %v541 = vpop.xlane.xlu0 %540
    %v542 = vsel %vm480, %v523, 0.0
    %543 = vadd.xlane.f32.xlu0 %v542
    %v544 = vpop.xlane.xlu0 %543
    %v545 = vsel %vm484, %v525, 0.0
    %546 = vadd.xlane.f32.xlu0 %v545
    %v547 = vpop.xlane.xlu0 %546
    %v548 = vsel %vm480, %v527, 0.0
    %549 = vadd.xlane.f32.xlu0 %v548
    %v550 = vpop.xlane.xlu0 %549
    %v551 = vsel %vm484, %v529, 0.0
    %552 = vadd.xlane.f32.xlu0 %v551
    %v553 = vpop.xlane.xlu0 %552
    %v554 = vrcp.pop %v532
    %v555 = vrcp.pop %v535
    %v556 = vrcp.pop %v538
    %v557 = vrcp.pop %v541
    %v558 = vrcp.pop %v544
    %v559 = vrcp.pop %v547
    %v560 = vrcp.pop %v550
    %v561 = vrcp.pop %v553
    %v562 = vmul.f32 %v515, %v554
    %v563 = vmul.f32 %v517, %v555
    %v564 = vmul.f32 %v519, %v556
    %v565 = vmul.f32 %v521, %v557
    %v566 = vmul.f32 %v523, %v558
    %v567 = vmul.f32 %v525, %v559
    %v568 = vmul.f32 %v527, %v560
    %v569 = vmul.f32 %v529, %v561
    %570 = vrot.lane.b32.xlu0 %v257, 112
    %v571 = vpop.permute.xlu0 %570
    %572 = vrot.lane.b32.xlu0 %v260, 112
    %v573 = vpop.permute.xlu0 %572
    %v576 = vsel %vm480, %v562, 0
    %v579 = vsel %vm480, %v563, 0
    %vm581 = vcmask 1041408
    %v582 = vsel %vm581, %v573, 0
    %584 = vmatpush.msra.mxu0 0.0
    %585 = vmatpush.msra.mxu0 0.0
    %586 = vmatpush.msra.mxu0 0.0
    %587 = vmatpush.msra.mxu0 0.0
    %588 = vmatpush.msra.mxu0 0.0
    %589 = vmatpush.msra.mxu0 0.0
    %590 = vmatpush.msra.mxu0 0.0
    %591 = vmatpush.msra.mxu0 0.0
    %592 = vmatpush.msra.mxu0 0.0
    %593 = vmatpush.msra.mxu0 0.0
    %594 = vmatpush.msra.mxu0 0.0
    %595 = vmatpush.msra.mxu0 0.0
    %596 = vmatpush.msra.mxu0 0.0
    %597 = vmatpush.msra.mxu0 0.0
    %598 = vmatpush.msra.mxu0 %v582
    %599 = vmatpush.msra.mxu0 %v571
    %600 = vmatmul.f32.gmra.mxu0 %v576
    %v601 = vpop.f32.mrf.mxu0
    %v602 = vadd.f32 0.0, %v601
    %603 = vmatmul.f32.gmra.mxu0 %v579
    %v604 = vpop.f32.mrf.mxu0
    %v605 = vadd.f32 0.0, %v604
    %606 = vdwg.mxu0
    %607 = vrot.lane.b32.xlu0 %v280, 112
    %v608 = vpop.permute.xlu0 %607
    %609 = vrot.lane.b32.xlu0 %v283, 112
    %v610 = vpop.permute.xlu0 %609
    %v613 = vsel %vm480, %v564, 0
    %v616 = vsel %vm480, %v565, 0
    %v618 = vsel %vm581, %v610, 0
    %620 = vmatpush.msra.mxu0 0.0
    %621 = vmatpush.msra.mxu0 0.0
    %622 = vmatpush.msra.mxu0 0.0
    %623 = vmatpush.msra.mxu0 0.0
    %624 = vmatpush.msra.mxu0 0.0
    %625 = vmatpush.msra.mxu0 0.0
    %626 = vmatpush.msra.mxu0 0.0
    %627 = vmatpush.msra.mxu0 0.0
    %628 = vmatpush.msra.mxu0 0.0
    %629 = vmatpush.msra.mxu0 0.0
    %630 = vmatpush.msra.mxu0 0.0
    %631 = vmatpush.msra.mxu0 0.0
    %632 = vmatpush.msra.mxu0 0.0
    %633 = vmatpush.msra.mxu0 0.0
    %634 = vmatpush.msra.mxu0 %v618
    %635 = vmatpush.msra.mxu0 %v608
    %636 = vmatmul.f32.gmra.mxu0 %v613
    %v637 = vpop.f32.mrf.mxu0
    %v638 = vadd.f32 0.0, %v637
    %639 = vmatmul.f32.gmra.mxu0 %v616
    %v640 = vpop.f32.mrf.mxu0
    %v641 = vadd.f32 0.0, %v640
    %642 = vdwg.mxu0
    %643 = vrot.lane.b32.xlu0 %v303, 112
    %v644 = vpop.permute.xlu0 %643
    %645 = vrot.lane.b32.xlu0 %v306, 112
    %v646 = vpop.permute.xlu0 %645
    %v649 = vsel %vm480, %v566, 0
    %v652 = vsel %vm480, %v567, 0
    %v654 = vsel %vm581, %v646, 0
    %656 = vmatpush.msra.mxu0 0.0
    %657 = vmatpush.msra.mxu0 0.0
    %658 = vmatpush.msra.mxu0 0.0
    %659 = vmatpush.msra.mxu0 0.0
    %660 = vmatpush.msra.mxu0 0.0
    %661 = vmatpush.msra.mxu0 0.0
    %662 = vmatpush.msra.mxu0 0.0
    %663 = vmatpush.msra.mxu0 0.0
    %664 = vmatpush.msra.mxu0 0.0
    %665 = vmatpush.msra.mxu0 0.0
    %666 = vmatpush.msra.mxu0 0.0
    %667 = vmatpush.msra.mxu0 0.0
    %668 = vmatpush.msra.mxu0 0.0
    %669 = vmatpush.msra.mxu0 0.0
    %670 = vmatpush.msra.mxu0 %v654
    %671 = vmatpush.msra.mxu0 %v644
    %672 = vmatmul.f32.gmra.mxu0 %v649
    %v673 = vpop.f32.mrf.mxu0
    %v674 = vadd.f32 0.0, %v673
    %675 = vmatmul.f32.gmra.mxu0 %v652
    %v676 = vpop.f32.mrf.mxu0
    %v677 = vadd.f32 0.0, %v676
    %678 = vdwg.mxu0
    %679 = vrot.lane.b32.xlu0 %v326, 112
    %v680 = vpop.permute.xlu0 %679
    %681 = vrot.lane.b32.xlu0 %v329, 112
    %v682 = vpop.permute.xlu0 %681
    %v685 = vsel %vm480, %v568, 0
    %v688 = vsel %vm480, %v569, 0
    %v690 = vsel %vm581, %v682, 0
    %692 = vmatpush.msra.mxu0 0.0
    %693 = vmatpush.msra.mxu0 0.0
    %694 = vmatpush.msra.mxu0 0.0
    %695 = vmatpush.msra.mxu0 0.0
    %696 = vmatpush.msra.mxu0 0.0
    %697 = vmatpush.msra.mxu0 0.0
    %698 = vmatpush.msra.mxu0 0.0
    %699 = vmatpush.msra.mxu0 0.0
    %700 = vmatpush.msra.mxu0 0.0
    %701 = vmatpush.msra.mxu0 0.0
    %702 = vmatpush.msra.mxu0 0.0
    %703 = vmatpush.msra.mxu0 0.0
    %704 = vmatpush.msra.mxu0 0.0
    %705 = vmatpush.msra.mxu0 0.0
    %706 = vmatpush.msra.mxu0 %v690
    %707 = vmatpush.msra.mxu0 %v680
    %708 = vmatmul.f32.gmra.mxu0 %v685
    %v709 = vpop.f32.mrf.mxu0
    %v710 = vadd.f32 0.0, %v709
    %711 = vmatmul.f32.gmra.mxu0 %v688
    %v712 = vpop.f32.mrf.mxu0
    %v713 = vadd.f32 0.0, %v712
    %714 = vdwg.mxu0
    %v715 = vld [vmem:[%s8] sm:$0xff]
    %v716 = vld [vmem:[%s8 + $0x8] sm:$0xff]
    %v717 = vld [vmem:[%s8 + $0x10] sm:$0xff]
    %v718 = vld [vmem:[%s8 + $0x18] sm:$0xff]
    %v720 = vsel %vm337, %v602, 0
    %v723 = vsel %vm337, %v605, 0
    %725 = vmatpush.msra.mxu0 0.0
    %726 = vmatpush.msra.mxu0 0.0
    %727 = vmatpush.msra.mxu0 0.0
    %728 = vmatpush.msra.mxu0 0.0
    %729 = vmatpush.msra.mxu0 0.0
    %730 = vmatpush.msra.mxu0 0.0
    %731 = vmatpush.msra.mxu0 0.0
    %732 = vmatpush.msra.mxu0 0.0
    %733 = vmatpush.msra.mxu0 0.0
    %734 = vmatpush.msra.mxu0 0.0
    %735 = vmatpush.msra.mxu0 0.0
    %736 = vmatpush.msra.mxu0 0.0
    %737 = vmatpush.msra.mxu0 0.0
    %738 = vmatpush.msra.mxu0 0.0
    %739 = vmatpush.msra.mxu0 0.0
    %740 = vmatpush.msra.mxu0 %v715
    %741 = vmatmul.f32.gmra.mxu0 %v720
    %v742 = vpop.f32.mrf.mxu0
    %v743 = vadd.f32 0.0, %v742
    %744 = vmatmul.f32.gmra.mxu0 %v723
    %v745 = vpop.f32.mrf.mxu0
    %v746 = vadd.f32 0.0, %v745
    %747 = vdwg.mxu0
    %v749 = vsel %vm337, %v638, 0
    %v752 = vsel %vm337, %v641, 0
    %754 = vmatpush.msra.mxu0 0.0
    %755 = vmatpush.msra.mxu0 0.0
    %756 = vmatpush.msra.mxu0 0.0
    %757 = vmatpush.msra.mxu0 0.0
    %758 = vmatpush.msra.mxu0 0.0
    %759 = vmatpush.msra.mxu0 0.0
    %760 = vmatpush.msra.mxu0 0.0
    %761 = vmatpush.msra.mxu0 0.0
    %762 = vmatpush.msra.mxu0 0.0
    %763 = vmatpush.msra.mxu0 0.0
    %764 = vmatpush.msra.mxu0 0.0
    %765 = vmatpush.msra.mxu0 0.0
    %766 = vmatpush.msra.mxu0 0.0
    %767 = vmatpush.msra.mxu0 0.0
    %768 = vmatpush.msra.mxu0 0.0
    %769 = vmatpush.msra.mxu0 %v716
    %770 = vmatmul.f32.gmra.mxu0 %v749
    %v771 = vpop.f32.mrf.mxu0
    %v772 = vadd.f32 0.0, %v771
    %773 = vmatmul.f32.gmra.mxu0 %v752
    %v774 = vpop.f32.mrf.mxu0
    %v775 = vadd.f32 0.0, %v774
    %776 = vdwg.mxu0
    %v778 = vsel %vm337, %v674, 0
    %v781 = vsel %vm337, %v677, 0
    %783 = vmatpush.msra.mxu0 0.0
    %784 = vmatpush.msra.mxu0 0.0
    %785 = vmatpush.msra.mxu0 0.0
    %786 = vmatpush.msra.mxu0 0.0
    %787 = vmatpush.msra.mxu0 0.0
    %788 = vmatpush.msra.mxu0 0.0
    %789 = vmatpush.msra.mxu0 0.0
    %790 = vmatpush.msra.mxu0 0.0
    %791 = vmatpush.msra.mxu0 0.0
    %792 = vmatpush.msra.mxu0 0.0
    %793 = vmatpush.msra.mxu0 0.0
    %794 = vmatpush.msra.mxu0 0.0
    %795 = vmatpush.msra.mxu0 0.0
    %796 = vmatpush.msra.mxu0 0.0
    %797 = vmatpush.msra.mxu0 0.0
    %798 = vmatpush.msra.mxu0 %v717
    %799 = vmatmul.f32.gmra.mxu0 %v778
    %v800 = vpop.f32.mrf.mxu0
    %v801 = vadd.f32 0.0, %v800
    %802 = vmatmul.f32.gmra.mxu0 %v781
    %v803 = vpop.f32.mrf.mxu0
    %v804 = vadd.f32 0.0, %v803
    %805 = vdwg.mxu0
    %v807 = vsel %vm337, %v710, 0
    %v810 = vsel %vm337, %v713, 0
    %812 = vmatpush.msra.mxu0 0.0
    %813 = vmatpush.msra.mxu0 0.0
    %814 = vmatpush.msra.mxu0 0.0
    %815 = vmatpush.msra.mxu0 0.0
    %816 = vmatpush.msra.mxu0 0.0
    %817 = vmatpush.msra.mxu0 0.0
    %818 = vmatpush.msra.mxu0 0.0
    %819 = vmatpush.msra.mxu0 0.0
    %820 = vmatpush.msra.mxu0 0.0
    %821 = vmatpush.msra.mxu0 0.0
    %822 = vmatpush.msra.mxu0 0.0
    %823 = vmatpush.msra.mxu0 0.0
    %824 = vmatpush.msra.mxu0 0.0
    %825 = vmatpush.msra.mxu0 0.0
    %826 = vmatpush.msra.mxu0 0.0
    %827 = vmatpush.msra.mxu0 %v718
    %828 = vmatmul.f32.gmra.mxu0 %v807
    %v829 = vpop.f32.mrf.mxu0
    %v830 = vadd.f32 0.0, %v829
    %831 = vmatmul.f32.gmra.mxu0 %v810
    %v832 = vpop.f32.mrf.mxu0
    %v833 = vadd.f32 0.0, %v832
    %834 = vdwg.mxu0
    %v835 = vsel %vm154, %v743, 0.0
    %v836 = vsel %vm154, %v772, 0.0
    %v837 = vadd.f32 %v835, %v836
    %v838 = vsel %vm154, %v801, 0.0
    %v839 = vadd.f32 %v837, %v838
    %v840 = vsel %vm154, %v830, 0.0
    %v841 = vadd.f32 %v839, %v840
    %v842 = vsel %vm158, %v746, 0.0
    %v843 = vsel %vm158, %v775, 0.0
    %v844 = vadd.f32 %v842, %v843
    %v845 = vsel %vm158, %v804, 0.0
    %v846 = vadd.f32 %v844, %v845
    %v847 = vsel %vm158, %v833, 0.0
    %v848 = vadd.f32 %v846, %v847
    %v849 = vadd.f32 %v145, %v841
    %v850 = vadd.f32 %v148, %v848
    %v851 = vld [vmem:[%s9] sm:$0x1]
    %v853 = vperm.slane %v851, 0
    %v855 = vadd.f32 %v849, %v853
    %v856 = vadd.f32 %v850, %v853
    %v857 = vld [vmem:[%s10] sm:$0x1]
    %v858 = vld [vmem:[%s11] sm:$0x1]
    %v859 = vsel %vm154, %v855, 0.0
    %860 = vadd.xlane.f32.xlu0 %v859
    %v861 = vpop.xlane.xlu0 %860
    %v862 = vsel %vm158, %v856, 0.0
    %863 = vadd.xlane.f32.xlu0 %v862
    %v864 = vpop.xlane.xlu0 %863
    %v865 = vmul.f32 %v861, %v168
    %v866 = vmul.f32 %v864, %v168
    %v867 = vsub.f32 %v855, %v865
    %v868 = vsub.f32 %v856, %v866
    %v869 = vmul.f32 %v867, %v867
    %v870 = vmul.f32 %v868, %v868
    %v871 = vsel %vm154, %v869, 0.0
    %872 = vadd.xlane.f32.xlu0 %v871
    %v873 = vpop.xlane.xlu0 %872
    %v874 = vsel %vm158, %v870, 0.0
    %875 = vadd.xlane.f32.xlu0 %v874
    %v876 = vpop.xlane.xlu0 %875
    %v877 = vmul.f32 %v873, %v168
    %v878 = vmul.f32 %v876, %v168
    %v879 = vadd.f32 %v877, 1e-05
    %v880 = vadd.f32 %v878, 1e-05
    %v881 = vrsqrt.pop %v879
    %v882 = vmul.f32 %v881, %v879
    %v883 = vmul.f32 %v882, %v881
    %v884 = vmul.f32 0.5, %v883
    %v885 = vsub.f32 1.5, %v884
    %v886 = vmul.f32 %v881, %v885
    %vm887 = vweird.f32 %v879
    %vm888 = vweird.f32 %v881
    %vm889 = vmor %vm887, %vm888
    %v890 = vsel %vm889, %v881, %v886
    %v891 = vrsqrt.pop %v880
    %v892 = vmul.f32 %v891, %v880
    %v893 = vmul.f32 %v892, %v891
    %v894 = vmul.f32 0.5, %v893
    %v895 = vsub.f32 1.5, %v894
    %v896 = vmul.f32 %v891, %v895
    %vm897 = vweird.f32 %v880
    %vm898 = vweird.f32 %v891
    %vm899 = vmor %vm897, %vm898
    %v900 = vsel %vm899, %v891, %v896
    %v901 = vmul.f32 %v867, %v890
    %v902 = vmul.f32 %v868, %v900
    %v904 = vperm.slane %v857, 0
    %v906 = vmul.f32 %v901, %v904
    %v907 = vmul.f32 %v902, %v904
    %v909 = vperm.slane %v858, 0
    %v911 = vadd.f32 %v906, %v909
    %v912 = vadd.f32 %v907, %v909
    %v913 = vld [vmem:[%s12] sm:$0xff]
    %v914 = vld [vmem:[%s12 + $0x8] sm:$0xff]
    %v915 = vld [vmem:[%s12 + $0x10] sm:$0xff]
    %v916 = vld [vmem:[%s12 + $0x18] sm:$0xff]
    %v917 = vld [vmem:[%s13] sm:$0x1]
    %v919 = vperm.slane %v917, 0
    %v922 = vsel %vm154, %v911, 0
    %v925 = vsel %vm154, %v912, 0
    %927 = vmatpush.msra.mxu0 0.0
    %928 = vmatpush.msra.mxu0 0.0
    %929 = vmatpush.msra.mxu0 0.0
    %930 = vmatpush.msra.mxu0 0.0
    %931 = vmatpush.msra.mxu0 0.0
    %932 = vmatpush.msra.mxu0 0.0
    %933 = vmatpush.msra.mxu0 0.0
    %934 = vmatpush.msra.mxu0 0.0
    %935 = vmatpush.msra.mxu0 0.0
    %936 = vmatpush.msra.mxu0 0.0
    %937 = vmatpush.msra.mxu0 0.0
    %938 = vmatpush.msra.mxu0 0.0
    %939 = vmatpush.msra.mxu0 %v916
    %940 = vmatpush.msra.mxu0 %v915
    %941 = vmatpush.msra.mxu0 %v914
    %942 = vmatpush.msra.mxu0 %v913
    %943 = vmatmul.f32.gmra.mxu0 %v922
    %v944 = vpop.f32.mrf.mxu0
    %v945 = vadd.f32 %v919, %v944
    %946 = vmatmul.f32.gmra.mxu0 %v925
    %v947 = vpop.f32.mrf.mxu0
    %v948 = vadd.f32 %v919, %v947
    %949 = vdwg.mxu0
    %v950 = vmul.f32 %v945, %v945
    %v951 = vmul.f32 %v948, %v948
    %v952 = vmul.f32 %v945, %v950
    %v953 = vmul.f32 %v948, %v951
    %v954 = vmul.f32 %v952, 0.044715
    %v955 = vmul.f32 %v953, 0.044715
    %v956 = vadd.f32 %v945, %v954
    %v957 = vadd.f32 %v948, %v955
    %v958 = vmul.f32 %v956, 0.7978846
    %v959 = vmul.f32 %v957, 0.7978846
    %v960 = vtanh.pop %v958
    %v961 = vtanh.pop %v959
    %v962 = vadd.f32 %v960, 1.0
    %v963 = vadd.f32 %v961, 1.0
    %v964 = vmul.f32 %v962, 0.5
    %v965 = vmul.f32 %v963, 0.5
    %v966 = vmul.f32 %v945, %v964
    %v967 = vmul.f32 %v948, %v965
    %v968 = vld [vmem:[%s14] sm:$0xff]
    %v969 = vld [vmem:[%s14 + $0x8] sm:$0xff]
    %v970 = vld [vmem:[%s14 + $0x10] sm:$0xff]
    %v971 = vld [vmem:[%s14 + $0x18] sm:$0xff]
    %v972 = vld [vmem:[%s14 + $0x20] sm:$0xff]
    %v973 = vld [vmem:[%s14 + $0x28] sm:$0xff]
    %v974 = vld [vmem:[%s14 + $0x30] sm:$0xff]
    %v975 = vld [vmem:[%s14 + $0x38] sm:$0xff]
    %v976 = vld [vmem:[%s15] sm:$0x1]
    %v978 = vperm.slane %v976, 0
    %vm980 = vcmask 523264
    %v982 = vsel %vm980, %v966, 0
    %v985 = vsel %vm980, %v967, 0
    %987 = vmatpush.msra.mxu0 0.0
    %988 = vmatpush.msra.mxu0 0.0
    %989 = vmatpush.msra.mxu0 0.0
    %990 = vmatpush.msra.mxu0 0.0
    %991 = vmatpush.msra.mxu0 0.0
    %992 = vmatpush.msra.mxu0 0.0
    %993 = vmatpush.msra.mxu0 0.0
    %994 = vmatpush.msra.mxu0 0.0
    %995 = vmatpush.msra.mxu0 %v975
    %996 = vmatpush.msra.mxu0 %v974
    %997 = vmatpush.msra.mxu0 %v973
    %998 = vmatpush.msra.mxu0 %v972
    %999 = vmatpush.msra.mxu0 %v971
    %1000 = vmatpush.msra.mxu0 %v970
    %1001 = vmatpush.msra.mxu0 %v969
    %1002 = vmatpush.msra.mxu0 %v968
    %1003 = vmatmul.f32.gmra.mxu0 %v982
    %v1004 = vpop.f32.mrf.mxu0
    %v1005 = vadd.f32 %v978, %v1004
    %1006 = vmatmul.f32.gmra.mxu0 %v985
    %v1007 = vpop.f32.mrf.mxu0
    %v1008 = vadd.f32 %v978, %v1007
    %1009 = vdwg.mxu0
    %v1010 = vadd.f32 %v855, %v1005
    %v1011 = vadd.f32 %v856, %v1008
    %s1012 = scalar_lea.vmem %s5, 1
    %v1013 = vld [vmem:[%s1012] sm:$0x1]
    %s1014 = scalar_lea.vmem %s6, 1
    %v1015 = vld [vmem:[%s1014] sm:$0x1]
    %v1016 = vsel %vm154, %v1010, 0.0
    %1017 = vadd.xlane.f32.xlu0 %v1016
    %v1018 = vpop.xlane.xlu0 %1017
    %v1019 = vsel %vm158, %v1011, 0.0
    %1020 = vadd.xlane.f32.xlu0 %v1019
    %v1021 = vpop.xlane.xlu0 %1020
    %v1022 = vmul.f32 %v1018, %v168
    %v1023 = vmul.f32 %v1021, %v168
    %v1024 = vsub.f32 %v1010, %v1022
    %v1025 = vsub.f32 %v1011, %v1023
    %v1026 = vmul.f32 %v1024, %v1024
    %v1027 = vmul.f32 %v1025, %v1025
    %v1028 = vsel %vm154, %v1026, 0.0
    %1029 = vadd.xlane.f32.xlu0 %v1028
    %v1030 = vpop.xlane.xlu0 %1029
    %v1031 = vsel %vm158, %v1027, 0.0
    %1032 = vadd.xlane.f32.xlu0 %v1031
    %v1033 = vpop.xlane.xlu0 %1032
    %v1034 = vmul.f32 %v1030, %v168
    %v1035 = vmul.f32 %v1033, %v168
    %v1036 = vadd.f32 %v1034, 1e-05
    %v1037 = vadd.f32 %v1035, 1e-05
    %v1038 = vrsqrt.pop %v1036
    %v1039 = vmul.f32 %v1038, %v1036
    %v1040 = vmul.f32 %v1039, %v1038
    %v1041 = vmul.f32 0.5, %v1040
    %v1042 = vsub.f32 1.5, %v1041
    %v1043 = vmul.f32 %v1038, %v1042
    %vm1044 = vweird.f32 %v1036
    %vm1045 = vweird.f32 %v1038
    %vm1046 = vmor %vm1044, %vm1045
    %v1047 = vsel %vm1046, %v1038, %v1043
    %v1048 = vrsqrt.pop %v1037
    %v1049 = vmul.f32 %v1048, %v1037
    %v1050 = vmul.f32 %v1049, %v1048
    %v1051 = vmul.f32 0.5, %v1050
    %v1052 = vsub.f32 1.5, %v1051
    %v1053 = vmul.f32 %v1048, %v1052
    %vm1054 = vweird.f32 %v1037
    %vm1055 = vweird.f32 %v1048
    %vm1056 = vmor %vm1054, %vm1055
    %v1057 = vsel %vm1056, %v1048, %v1053
    %v1058 = vmul.f32 %v1024, %v1047
    %v1059 = vmul.f32 %v1025, %v1057
    %v1061 = vperm.slane %v1013, 0
    %v1063 = vmul.f32 %v1058, %v1061
    %v1064 = vmul.f32 %v1059, %v1061
    %v1066 = vperm.slane %v1015, 0
    %v1068 = vadd.f32 %v1063, %v1066
    %v1069 = vadd.f32 %v1064, %v1066
    %s1070 = scalar_lea.vmem %s7, 128
    %v1071 = vld [vmem:[%s1070] sm:$0xff]
    %v1072 = vld [vmem:[%s1070 + $0x8] sm:$0xff]
    %v1073 = vld [vmem:[%s1070 + $0x10] sm:$0xff]
    %v1074 = vld [vmem:[%s1070 + $0x18] sm:$0xff]
    %v1075 = vld [vmem:[%s1070 + $0x20] sm:$0xff]
    %v1076 = vld [vmem:[%s1070 + $0x28] sm:$0xff]
    %v1077 = vld [vmem:[%s1070 + $0x30] sm:$0xff]
    %v1078 = vld [vmem:[%s1070 + $0x38] sm:$0xff]
    %v1079 = vld [vmem:[%s1070 + $0x40] sm:$0xff]
    %v1080 = vld [vmem:[%s1070 + $0x48] sm:$0xff]
    %v1081 = vld [vmem:[%s1070 + $0x50] sm:$0xff]
    %v1082 = vld [vmem:[%s1070 + $0x58] sm:$0xff]
    %v1083 = vld [vmem:[%s1070 + $0x60] sm:$0xff]
    %v1084 = vld [vmem:[%s1070 + $0x68] sm:$0xff]
    %v1085 = vld [vmem:[%s1070 + $0x70] sm:$0xff]
    %v1086 = vld [vmem:[%s1070 + $0x78] sm:$0xff]
    %v1088 = vsel %vm154, %v1068, 0
    %v1091 = vsel %vm154, %v1069, 0
    %1093 = vmatpush.msra.mxu0 0.0
    %1094 = vmatpush.msra.mxu0 0.0
    %1095 = vmatpush.msra.mxu0 0.0
    %1096 = vmatpush.msra.mxu0 0.0
    %1097 = vmatpush.msra.mxu0 0.0
    %1098 = vmatpush.msra.mxu0 0.0
    %1099 = vmatpush.msra.mxu0 0.0
    %1100 = vmatpush.msra.mxu0 0.0
    %1101 = vmatpush.msra.mxu0 0.0
    %1102 = vmatpush.msra.mxu0 0.0
    %1103 = vmatpush.msra.mxu0 0.0
    %1104 = vmatpush.msra.mxu0 0.0
    %1105 = vmatpush.msra.mxu0 %v1074
    %1106 = vmatpush.msra.mxu0 %v1073
    %1107 = vmatpush.msra.mxu0 %v1072
    %1108 = vmatpush.msra.mxu0 %v1071
    %1109 = vmatmul.f32.gmra.mxu0 %v1088
    %v1110 = vpop.f32.mrf.mxu0
    %v1111 = vadd.f32 0.0, %v1110
    %1112 = vmatmul.f32.gmra.mxu0 %v1091
    %v1113 = vpop.f32.mrf.mxu0
    %v1114 = vadd.f32 0.0, %v1113
    %1115 = vdwg.mxu0
    %1116 = vmatpush.msra.mxu0 0.0
    %1117 = vmatpush.msra.mxu0 0.0
    %1118 = vmatpush.msra.mxu0 0.0
    %1119 = vmatpush.msra.mxu0 0.0
    %1120 = vmatpush.msra.mxu0 0.0
    %1121 = vmatpush.msra.mxu0 0.0
    %1122 = vmatpush.msra.mxu0 0.0
    %1123 = vmatpush.msra.mxu0 0.0
    %1124 = vmatpush.msra.mxu0 0.0
    %1125 = vmatpush.msra.mxu0 0.0
    %1126 = vmatpush.msra.mxu0 0.0
    %1127 = vmatpush.msra.mxu0 0.0
    %1128 = vmatpush.msra.mxu0 %v1078
    %1129 = vmatpush.msra.mxu0 %v1077
    %1130 = vmatpush.msra.mxu0 %v1076
    %1131 = vmatpush.msra.mxu0 %v1075
    %1132 = vmatmul.f32.gmra.mxu0 %v1088
    %v1133 = vpop.f32.mrf.mxu0
    %v1134 = vadd.f32 0.0, %v1133
    %1135 = vmatmul.f32.gmra.mxu0 %v1091
    %v1136 = vpop.f32.mrf.mxu0
    %v1137 = vadd.f32 0.0, %v1136
    %1138 = vdwg.mxu0
    %1139 = vmatpush.msra.mxu0 0.0
    %1140 = vmatpush.msra.mxu0 0.0
    %1141 = vmatpush.msra.mxu0 0.0
    %1142 = vmatpush.msra.mxu0 0.0
    %1143 = vmatpush.msra.mxu0 0.0
    %1144 = vmatpush.msra.mxu0 0.0
    %1145 = vmatpush.msra.mxu0 0.0
    %1146 = vmatpush.msra.mxu0 0.0
    %1147 = vmatpush.msra.mxu0 0.0
    %1148 = vmatpush.msra.mxu0 0.0
    %1149 = vmatpush.msra.mxu0 0.0
    %1150 = vmatpush.msra.mxu0 0.0
    %1151 = vmatpush.msra.mxu0 %v1082
    %1152 = vmatpush.msra.mxu0 %v1081
    %1153 = vmatpush.msra.mxu0 %v1080
    %1154 = vmatpush.msra.mxu0 %v1079
    %1155 = vmatmul.f32.gmra.mxu0 %v1088
    %v1156 = vpop.f32.mrf.mxu0
    %v1157 = vadd.f32 0.0, %v1156
    %1158 = vmatmul.f32.gmra.mxu0 %v1091
    %v1159 = vpop.f32.mrf.mxu0
    %v1160 = vadd.f32 0.0, %v1159
    %1161 = vdwg.mxu0
    %1162 = vmatpush.msra.mxu0 0.0
    %1163 = vmatpush.msra.mxu0 0.0
    %1164 = vmatpush.msra.mxu0 0.0
    %1165 = vmatpush.msra.mxu0 0.0
    %1166 = vmatpush.msra.mxu0 0.0
    %1167 = vmatpush.msra.mxu0 0.0
    %1168 = vmatpush.msra.mxu0 0.0
    %1169 = vmatpush.msra.mxu0 0.0
    %1170 = vmatpush.msra.mxu0 0.0
    %1171 = vmatpush.msra.mxu0 0.0
    %1172 = vmatpush.msra.mxu0 0.0
    %1173 = vmatpush.msra.mxu0 0.0
    %1174 = vmatpush.msra.mxu0 %v1086
    %1175 = vmatpush.msra.mxu0 %v1085
    %1176 = vmatpush.msra.mxu0 %v1084
    %1177 = vmatpush.msra.mxu0 %v1083
    %1178 = vmatmul.f32.gmra.mxu0 %v1088
    %v1179 = vpop.f32.mrf.mxu0
    %v1180 = vadd.f32 0.0, %v1179
    %1181 = vmatmul.f32.gmra.mxu0 %v1091
    %v1182 = vpop.f32.mrf.mxu0
    %v1183 = vadd.f32 0.0, %v1182
    %1184 = vdwg.mxu0
    %1187 = vrot.lane.b32.xlu0 %v1111, 120
    %v1188 = vpop.permute.xlu0 %1187
    %1189 = vrot.lane.b32.xlu0 %v1114, 120
    %v1190 = vpop.permute.xlu0 %1189
    %v1191 = vsel %vm337, %v1111, 0
    %v1193 = vsel %vm337, %v1114, 0
    %v1195 = vsel %vm337, %v1188, 0
    %v1197 = vsel %vm337, %v1190, 0
    %1199 = vmatpush.xpose.msra.mxu0 0.0
    %1200 = vmatpush.xpose.msra.mxu0 0.0
    %1201 = vmatpush.xpose.msra.mxu0 0.0
    %1202 = vmatpush.xpose.msra.mxu0 0.0
    %1203 = vmatpush.xpose.msra.mxu0 0.0
    %1204 = vmatpush.xpose.msra.mxu0 0.0
    %1205 = vmatpush.xpose.msra.mxu0 0.0
    %1206 = vmatpush.xpose.msra.mxu0 0.0
    %1207 = vmatpush.xpose.msra.mxu0 0.0
    %1208 = vmatpush.xpose.msra.mxu0 0.0
    %1209 = vmatpush.xpose.msra.mxu0 0.0
    %1210 = vmatpush.xpose.msra.mxu0 0.0
    %1211 = vmatpush.xpose.msra.mxu0 0.0
    %1212 = vmatpush.xpose.msra.mxu0 0.0
    %1213 = vmatpush.xpose.msra.mxu0 %v1197
    %1214 = vmatpush.xpose.msra.mxu0 %v1195
    %1215 = vmatmul.f32.gmra.mxu0 %v1191
    %v1216 = vpop.f32.mrf.mxu0
    %v1217 = vadd.f32 %v150, %v1216
    %1218 = vmatmul.f32.gmra.mxu0 %v1193
    %v1219 = vpop.f32.mrf.mxu0
    %v1220 = vadd.f32 %v151, %v1219
    %1221 = vdwg.mxu0
    %1224 = vrot.lane.b32.xlu0 %v1134, 120
    %v1225 = vpop.permute.xlu0 %1224
    %1226 = vrot.lane.b32.xlu0 %v1137, 120
    %v1227 = vpop.permute.xlu0 %1226
    %v1228 = vsel %vm337, %v1134, 0
    %v1230 = vsel %vm337, %v1137, 0
    %v1232 = vsel %vm337, %v1225, 0
    %v1234 = vsel %vm337, %v1227, 0
    %1236 = vmatpush.xpose.msra.mxu0 0.0
    %1237 = vmatpush.xpose.msra.mxu0 0.0
    %1238 = vmatpush.xpose.msra.mxu0 0.0
    %1239 = vmatpush.xpose.msra.mxu0 0.0
    %1240 = vmatpush.xpose.msra.mxu0 0.0
    %1241 = vmatpush.xpose.msra.mxu0 0.0
    %1242 = vmatpush.xpose.msra.mxu0 0.0
    %1243 = vmatpush.xpose.msra.mxu0 0.0
    %1244 = vmatpush.xpose.msra.mxu0 0.0
    %1245 = vmatpush.xpose.msra.mxu0 0.0
    %1246 = vmatpush.xpose.msra.mxu0 0.0
    %1247 = vmatpush.xpose.msra.mxu0 0.0
    %1248 = vmatpush.xpose.msra.mxu0 0.0
    %1249 = vmatpush.xpose.msra.mxu0 0.0
    %1250 = vmatpush.xpose.msra.mxu0 %v1234
    %1251 = vmatpush.xpose.msra.mxu0 %v1232
    %1252 = vmatmul.f32.gmra.mxu0 %v1228
    %v1253 = vpop.f32.mrf.mxu0
    %v1254 = vadd.f32 %v150, %v1253
    %1255 = vmatmul.f32.gmra.mxu0 %v1230
    %v1256 = vpop.f32.mrf.mxu0
    %v1257 = vadd.f32 %v151, %v1256
    %1258 = vdwg.mxu0
    %1261 = vrot.lane.b32.xlu0 %v1157, 120
    %v1262 = vpop.permute.xlu0 %1261
    %1263 = vrot.lane.b32.xlu0 %v1160, 120
    %v1264 = vpop.permute.xlu0 %1263
    %v1265 = vsel %vm337, %v1157, 0
    %v1267 = vsel %vm337, %v1160, 0
    %v1269 = vsel %vm337, %v1262, 0
    %v1271 = vsel %vm337, %v1264, 0
    %1273 = vmatpush.xpose.msra.mxu0 0.0
    %1274 = vmatpush.xpose.msra.mxu0 0.0
    %1275 = vmatpush.xpose.msra.mxu0 0.0
    %1276 = vmatpush.xpose.msra.mxu0 0.0
    %1277 = vmatpush.xpose.msra.mxu0 0.0
    %1278 = vmatpush.xpose.msra.mxu0 0.0
    %1279 = vmatpush.xpose.msra.mxu0 0.0
    %1280 = vmatpush.xpose.msra.mxu0 0.0
    %1281 = vmatpush.xpose.msra.mxu0 0.0
    %1282 = vmatpush.xpose.msra.mxu0 0.0
    %1283 = vmatpush.xpose.msra.mxu0 0.0
    %1284 = vmatpush.xpose.msra.mxu0 0.0
    %1285 = vmatpush.xpose.msra.mxu0 0.0
    %1286 = vmatpush.xpose.msra.mxu0 0.0
    %1287 = vmatpush.xpose.msra.mxu0 %v1271
    %1288 = vmatpush.xpose.msra.mxu0 %v1269
    %1289 = vmatmul.f32.gmra.mxu0 %v1265
    %v1290 = vpop.f32.mrf.mxu0
    %v1291 = vadd.f32 %v150, %v1290
    %1292 = vmatmul.f32.gmra.mxu0 %v1267
    %v1293 = vpop.f32.mrf.mxu0
    %v1294 = vadd.f32 %v151, %v1293
    %1295 = vdwg.mxu0
    %1298 = vrot.lane.b32.xlu0 %v1180, 120
    %v1299 = vpop.permute.xlu0 %1298
    %1300 = vrot.lane.b32.xlu0 %v1183, 120
    %v1301 = vpop.permute.xlu0 %1300
    %v1302 = vsel %vm337, %v1180, 0
    %v1304 = vsel %vm337, %v1183, 0
    %v1306 = vsel %vm337, %v1299, 0
    %v1308 = vsel %vm337, %v1301, 0
    %1310 = vmatpush.xpose.msra.mxu0 0.0
    %1311 = vmatpush.xpose.msra.mxu0 0.0
    %1312 = vmatpush.xpose.msra.mxu0 0.0
    %1313 = vmatpush.xpose.msra.mxu0 0.0
    %1314 = vmatpush.xpose.msra.mxu0 0.0
    %1315 = vmatpush.xpose.msra.mxu0 0.0
    %1316 = vmatpush.xpose.msra.mxu0 0.0
    %1317 = vmatpush.xpose.msra.mxu0 0.0
    %1318 = vmatpush.xpose.msra.mxu0 0.0
    %1319 = vmatpush.xpose.msra.mxu0 0.0
    %1320 = vmatpush.xpose.msra.mxu0 0.0
    %1321 = vmatpush.xpose.msra.mxu0 0.0
    %1322 = vmatpush.xpose.msra.mxu0 0.0
    %1323 = vmatpush.xpose.msra.mxu0 0.0
    %1324 = vmatpush.xpose.msra.mxu0 %v1308
    %1325 = vmatpush.xpose.msra.mxu0 %v1306
    %1326 = vmatmul.f32.gmra.mxu0 %v1302
    %v1327 = vpop.f32.mrf.mxu0
    %v1328 = vadd.f32 %v150, %v1327
    %1329 = vmatmul.f32.gmra.mxu0 %v1304
    %v1330 = vpop.f32.mrf.mxu0
    %v1331 = vadd.f32 %v151, %v1330
    %1332 = vdwg.mxu0
    %v1333 = vsel %vm480, %v1217, -inf
    %1334 = vmax.xlane.f32.xlu0 %v1333
    %v1335 = vpop.xlane.xlu0 %1334
    %v1336 = vsel %vm484, %v1220, -inf
    %1337 = vmax.xlane.f32.xlu0 %v1336
    %v1338 = vpop.xlane.xlu0 %1337
    %v1339 = vsel %vm480, %v1254, -inf
    %1340 = vmax.xlane.f32.xlu0 %v1339
    %v1341 = vpop.xlane.xlu0 %1340
    %v1342 = vsel %vm484, %v1257, -inf
    %1343 = vmax.xlane.f32.xlu0 %v1342
    %v1344 = vpop.xlane.xlu0 %1343
    %v1345 = vsel %vm480, %v1291, -inf
    %1346 = vmax.xlane.f32.xlu0 %v1345
    %v1347 = vpop.xlane.xlu0 %1346
    %v1348 = vsel %vm484, %v1294, -inf
    %1349 = vmax.xlane.f32.xlu0 %v1348
    %v1350 = vpop.xlane.xlu0 %1349
    %v1351 = vsel %vm480, %v1328, -inf
    %1352 = vmax.xlane.f32.xlu0 %v1351
    %v1353 = vpop.xlane.xlu0 %1352
    %v1354 = vsel %vm484, %v1331, -inf
    %1355 = vmax.xlane.f32.xlu0 %v1354
    %v1356 = vpop.xlane.xlu0 %1355
    %v1357 = vsub.f32 %v1217, %v1335
    %v1358 = vsub.f32 %v1220, %v1338
    %v1359 = vsub.f32 %v1254, %v1341
    %v1360 = vsub.f32 %v1257, %v1344
    %v1361 = vsub.f32 %v1291, %v1347
    %v1362 = vsub.f32 %v1294, %v1350
    %v1363 = vsub.f32 %v1328, %v1353
    %v1364 = vsub.f32 %v1331, %v1356
    %v1365 = vmul.f32 %v1357, 1.442695
    %v1366 = vpow.pop %v1365
    %v1367 = vmul.f32 %v1358, 1.442695
    %v1368 = vpow.pop %v1367
    %v1369 = vmul.f32 %v1359, 1.442695
    %v1370 = vpow.pop %v1369
    %v1371 = vmul.f32 %v1360, 1.442695
    %v1372 = vpow.pop %v1371
    %v1373 = vmul.f32 %v1361, 1.442695
    %v1374 = vpow.pop %v1373
    %v1375 = vmul.f32 %v1362, 1.442695
    %v1376 = vpow.pop %v1375
    %v1377 = vmul.f32 %v1363, 1.442695
    %v1378 = vpow.pop %v1377
    %v1379 = vmul.f32 %v1364, 1.442695
    %v1380 = vpow.pop %v1379
    %v1381 = vsel %vm480, %v1366, 0.0
    %1382 = vadd.xlane.f32.xlu0 %v1381
    %v1383 = vpop.xlane.xlu0 %1382
    %v1384 = vsel %vm484, %v1368, 0.0
    %1385 = vadd.xlane.f32.xlu0 %v1384
    %v1386 = vpop.xlane.xlu0 %1385
    %v1387 = vsel %vm480, %v1370, 0.0
    %1388 = vadd.xlane.f32.xlu0 %v1387
    %v1389 = vpop.xlane.xlu0 %1388
    %v1390 = vsel %vm484, %v1372, 0.0
    %1391 = vadd.xlane.f32.xlu0 %v1390
    %v1392 = vpop.xlane.xlu0 %1391
    %v1393 = vsel %vm480, %v1374, 0.0
    %1394 = vadd.xlane.f32.xlu0 %v1393
    %v1395 = vpop.xlane.xlu0 %1394
    %v1396 = vsel %vm484, %v1376, 0.0
    %1397 = vadd.xlane.f32.xlu0 %v1396
    %v1398 = vpop.xlane.xlu0 %1397
    %v1399 = vsel %vm480, %v1378, 0.0
    %1400 = vadd.xlane.f32.xlu0 %v1399
    %v1401 = vpop.xlane.xlu0 %1400
    %v1402 = vsel %vm484, %v1380, 0.0
    %1403 = vadd.xlane.f32.xlu0 %v1402
    %v1404 = vpop.xlane.xlu0 %1403
    %v1405 = vrcp.pop %v1383
    %v1406 = vrcp.pop %v1386
    %v1407 = vrcp.pop %v1389
    %v1408 = vrcp.pop %v1392
    %v1409 = vrcp.pop %v1395
    %v1410 = vrcp.pop %v1398
    %v1411 = vrcp.pop %v1401
    %v1412 = vrcp.pop %v1404
    %v1413 = vmul.f32 %v1366, %v1405
    %v1414 = vmul.f32 %v1368, %v1406
    %v1415 = vmul.f32 %v1370, %v1407
    %v1416 = vmul.f32 %v1372, %v1408
    %v1417 = vmul.f32 %v1374, %v1409
    %v1418 = vmul.f32 %v1376, %v1410
    %v1419 = vmul.f32 %v1378, %v1411
    %v1420 = vmul.f32 %v1380, %v1412
    %1421 = vrot.lane.b32.xlu0 %v1111, 112
    %v1422 = vpop.permute.xlu0 %1421
    %1423 = vrot.lane.b32.xlu0 %v1114, 112
    %v1424 = vpop.permute.xlu0 %1423
    %v1427 = vsel %vm480, %v1413, 0
    %v1430 = vsel %vm480, %v1414, 0
    %v1432 = vsel %vm581, %v1424, 0
    %1434 = vmatpush.msra.mxu0 0.0
    %1435 = vmatpush.msra.mxu0 0.0
    %1436 = vmatpush.msra.mxu0 0.0
    %1437 = vmatpush.msra.mxu0 0.0
    %1438 = vmatpush.msra.mxu0 0.0
    %1439 = vmatpush.msra.mxu0 0.0
    %1440 = vmatpush.msra.mxu0 0.0
    %1441 = vmatpush.msra.mxu0 0.0
    %1442 = vmatpush.msra.mxu0 0.0
    %1443 = vmatpush.msra.mxu0 0.0
    %1444 = vmatpush.msra.mxu0 0.0
    %1445 = vmatpush.msra.mxu0 0.0
    %1446 = vmatpush.msra.mxu0 0.0
    %1447 = vmatpush.msra.mxu0 0.0
    %1448 = vmatpush.msra.mxu0 %v1432
    %1449 = vmatpush.msra.mxu0 %v1422
    %1450 = vmatmul.f32.gmra.mxu0 %v1427
    %v1451 = vpop.f32.mrf.mxu0
    %v1452 = vadd.f32 0.0, %v1451
    %1453 = vmatmul.f32.gmra.mxu0 %v1430
    %v1454 = vpop.f32.mrf.mxu0
    %v1455 = vadd.f32 0.0, %v1454
    %1456 = vdwg.mxu0
    %1457 = vrot.lane.b32.xlu0 %v1134, 112
    %v1458 = vpop.permute.xlu0 %1457
    %1459 = vrot.lane.b32.xlu0 %v1137, 112
    %v1460 = vpop.permute.xlu0 %1459
    %v1463 = vsel %vm480, %v1415, 0
    %v1466 = vsel %vm480, %v1416, 0
    %v1468 = vsel %vm581, %v1460, 0
    %1470 = vmatpush.msra.mxu0 0.0
    %1471 = vmatpush.msra.mxu0 0.0
    %1472 = vmatpush.msra.mxu0 0.0
    %1473 = vmatpush.msra.mxu0 0.0
    %1474 = vmatpush.msra.mxu0 0.0
    %1475 = vmatpush.msra.mxu0 0.0
    %1476 = vmatpush.msra.mxu0 0.0
    %1477 = vmatpush.msra.mxu0 0.0
    %1478 = vmatpush.msra.mxu0 0.0
    %1479 = vmatpush.msra.mxu0 0.0
    %1480 = vmatpush.msra.mxu0 0.0
    %1481 = vmatpush.msra.mxu0 0.0
    %1482 = vmatpush.msra.mxu0 0.0
    %1483 = vmatpush.msra.mxu0 0.0
    %1484 = vmatpush.msra.mxu0 %v1468
    %1485 = vmatpush.msra.mxu0 %v1458
    %1486 = vmatmul.f32.gmra.mxu0 %v1463
    %v1487 = vpop.f32.mrf.mxu0
    %v1488 = vadd.f32 0.0, %v1487
    %1489 = vmatmul.f32.gmra.mxu0 %v1466
    %v1490 = vpop.f32.mrf.mxu0
    %v1491 = vadd.f32 0.0, %v1490
    %1492 = vdwg.mxu0
    %1493 = vrot.lane.b32.xlu0 %v1157, 112
    %v1494 = vpop.permute.xlu0 %1493
    %1495 = vrot.lane.b32.xlu0 %v1160, 112
    %v1496 = vpop.permute.xlu0 %1495
    %v1499 = vsel %vm480, %v1417, 0
    %v1502 = vsel %vm480, %v1418, 0
    %v1504 = vsel %vm581, %v1496, 0
    %1506 = vmatpush.msra.mxu0 0.0
    %1507 = vmatpush.msra.mxu0 0.0
    %1508 = vmatpush.msra.mxu0 0.0
    %1509 = vmatpush.msra.mxu0 0.0
    %1510 = vmatpush.msra.mxu0 0.0
    %1511 = vmatpush.msra.mxu0 0.0
    %1512 = vmatpush.msra.mxu0 0.0
    %1513 = vmatpush.msra.mxu0 0.0
    %1514 = vmatpush.msra.mxu0 0.0
    %1515 = vmatpush.msra.mxu0 0.0
    %1516 = vmatpush.msra.mxu0 0.0
    %1517 = vmatpush.msra.mxu0 0.0
    %1518 = vmatpush.msra.mxu0 0.0
    %1519 = vmatpush.msra.mxu0 0.0
    %1520 = vmatpush.msra.mxu0 %v1504
    %1521 = vmatpush.msra.mxu0 %v1494
    %1522 = vmatmul.f32.gmra.mxu0 %v1499
    %v1523 = vpop.f32.mrf.mxu0
    %v1524 = vadd.f32 0.0, %v1523
    %1525 = vmatmul.f32.gmra.mxu0 %v1502
    %v1526 = vpop.f32.mrf.mxu0
    %v1527 = vadd.f32 0.0, %v1526
    %1528 = vdwg.mxu0
    %1529 = vrot.lane.b32.xlu0 %v1180, 112
    %v1530 = vpop.permute.xlu0 %1529
    %1531 = vrot.lane.b32.xlu0 %v1183, 112
    %v1532 = vpop.permute.xlu0 %1531
    %v1535 = vsel %vm480, %v1419, 0
    %v1538 = vsel %vm480, %v1420, 0
    %v1540 = vsel %vm581, %v1532, 0
    %1542 = vmatpush.msra.mxu0 0.0
    %1543 = vmatpush.msra.mxu0 0.0
    %1544 = vmatpush.msra.mxu0 0.0
    %1545 = vmatpush.msra.mxu0 0.0
    %1546 = vmatpush.msra.mxu0 0.0
    %1547 = vmatpush.msra.mxu0 0.0
    %1548 = vmatpush.msra.mxu0 0.0
    %1549 = vmatpush.msra.mxu0 0.0
    %1550 = vmatpush.msra.mxu0 0.0
    %1551 = vmatpush.msra.mxu0 0.0
    %1552 = vmatpush.msra.mxu0 0.0
    %1553 = vmatpush.msra.mxu0 0.0
    %1554 = vmatpush.msra.mxu0 0.0
    %1555 = vmatpush.msra.mxu0 0.0
    %1556 = vmatpush.msra.mxu0 %v1540
    %1557 = vmatpush.msra.mxu0 %v1530
    %1558 = vmatmul.f32.gmra.mxu0 %v1535
    %v1559 = vpop.f32.mrf.mxu0
    %v1560 = vadd.f32 0.0, %v1559
    %1561 = vmatmul.f32.gmra.mxu0 %v1538
    %v1562 = vpop.f32.mrf.mxu0
    %v1563 = vadd.f32 0.0, %v1562
    %1564 = vdwg.mxu0
    %s1565 = scalar_lea.vmem %s8, 32
    %v1566 = vld [vmem:[%s1565] sm:$0xff]
    %v1567 = vld [vmem:[%s1565 + $0x8] sm:$0xff]
    %v1568 = vld [vmem:[%s1565 + $0x10] sm:$0xff]
    %v1569 = vld [vmem:[%s1565 + $0x18] sm:$0xff]
    %v1571 = vsel %vm337, %v1452, 0
    %v1574 = vsel %vm337, %v1455, 0
    %1576 = vmatpush.msra.mxu0 0.0
    %1577 = vmatpush.msra.mxu0 0.0
    %1578 = vmatpush.msra.mxu0 0.0
    %1579 = vmatpush.msra.mxu0 0.0
    %1580 = vmatpush.msra.mxu0 0.0
    %1581 = vmatpush.msra.mxu0 0.0
    %1582 = vmatpush.msra.mxu0 0.0
    %1583 = vmatpush.msra.mxu0 0.0
    %1584 = vmatpush.msra.mxu0 0.0
    %1585 = vmatpush.msra.mxu0 0.0
    %1586 = vmatpush.msra.mxu0 0.0
    %1587 = vmatpush.msra.mxu0 0.0
    %1588 = vmatpush.msra.mxu0 0.0
    %1589 = vmatpush.msra.mxu0 0.0
    %1590 = vmatpush.msra.mxu0 0.0
    %1591 = vmatpush.msra.mxu0 %v1566
    %1592 = vmatmul.f32.gmra.mxu0 %v1571
    %v1593 = vpop.f32.mrf.mxu0
    %v1594 = vadd.f32 0.0, %v1593
    %1595 = vmatmul.f32.gmra.mxu0 %v1574
    %v1596 = vpop.f32.mrf.mxu0
    %v1597 = vadd.f32 0.0, %v1596
    %1598 = vdwg.mxu0
    %v1600 = vsel %vm337, %v1488, 0
    %v1603 = vsel %vm337, %v1491, 0
    %1605 = vmatpush.msra.mxu0 0.0
    %1606 = vmatpush.msra.mxu0 0.0
    %1607 = vmatpush.msra.mxu0 0.0
    %1608 = vmatpush.msra.mxu0 0.0
    %1609 = vmatpush.msra.mxu0 0.0
    %1610 = vmatpush.msra.mxu0 0.0
    %1611 = vmatpush.msra.mxu0 0.0
    %1612 = vmatpush.msra.mxu0 0.0
    %1613 = vmatpush.msra.mxu0 0.0
    %1614 = vmatpush.msra.mxu0 0.0
    %1615 = vmatpush.msra.mxu0 0.0
    %1616 = vmatpush.msra.mxu0 0.0
    %1617 = vmatpush.msra.mxu0 0.0
    %1618 = vmatpush.msra.mxu0 0.0
    %1619 = vmatpush.msra.mxu0 0.0
    %1620 = vmatpush.msra.mxu0 %v1567
    %1621 = vmatmul.f32.gmra.mxu0 %v1600
    %v1622 = vpop.f32.mrf.mxu0
    %v1623 = vadd.f32 0.0, %v1622
    %1624 = vmatmul.f32.gmra.mxu0 %v1603
    %v1625 = vpop.f32.mrf.mxu0
    %v1626 = vadd.f32 0.0, %v1625
    %1627 = vdwg.mxu0
    %v1629 = vsel %vm337, %v1524, 0
    %v1632 = vsel %vm337, %v1527, 0
    %1634 = vmatpush.msra.mxu0 0.0
    %1635 = vmatpush.msra.mxu0 0.0
    %1636 = vmatpush.msra.mxu0 0.0
    %1637 = vmatpush.msra.mxu0 0.0
    %1638 = vmatpush.msra.mxu0 0.0
    %1639 = vmatpush.msra.mxu0 0.0
    %1640 = vmatpush.msra.mxu0 0.0
    %1641 = vmatpush.msra.mxu0 0.0
    %1642 = vmatpush.msra.mxu0 0.0
    %1643 = vmatpush.msra.mxu0 0.0
    %1644 = vmatpush.msra.mxu0 0.0
    %1645 = vmatpush.msra.mxu0 0.0
    %1646 = vmatpush.msra.mxu0 0.0
    %1647 = vmatpush.msra.mxu0 0.0
    %1648 = vmatpush.msra.mxu0 0.0
    %1649 = vmatpush.msra.mxu0 %v1568
    %1650 = vmatmul.f32.gmra.mxu0 %v1629
    %v1651 = vpop.f32.mrf.mxu0
    %v1652 = vadd.f32 0.0, %v1651
    %1653 = vmatmul.f32.gmra.mxu0 %v1632
    %v1654 = vpop.f32.mrf.mxu0
    %v1655 = vadd.f32 0.0, %v1654
    %1656 = vdwg.mxu0
    %v1658 = vsel %vm337, %v1560, 0
    %v1661 = vsel %vm337, %v1563, 0
    %1663 = vmatpush.msra.mxu0 0.0
    %1664 = vmatpush.msra.mxu0 0.0
    %1665 = vmatpush.msra.mxu0 0.0
    %1666 = vmatpush.msra.mxu0 0.0
    %1667 = vmatpush.msra.mxu0 0.0
    %1668 = vmatpush.msra.mxu0 0.0
    %1669 = vmatpush.msra.mxu0 0.0
    %1670 = vmatpush.msra.mxu0 0.0
    %1671 = vmatpush.msra.mxu0 0.0
    %1672 = vmatpush.msra.mxu0 0.0
    %1673 = vmatpush.msra.mxu0 0.0
    %1674 = vmatpush.msra.mxu0 0.0
    %1675 = vmatpush.msra.mxu0 0.0
    %1676 = vmatpush.msra.mxu0 0.0
    %1677 = vmatpush.msra.mxu0 0.0
    %1678 = vmatpush.msra.mxu0 %v1569
    %1679 = vmatmul.f32.gmra.mxu0 %v1658
    %v1680 = vpop.f32.mrf.mxu0
    %v1681 = vadd.f32 0.0, %v1680
    %1682 = vmatmul.f32.gmra.mxu0 %v1661
    %v1683 = vpop.f32.mrf.mxu0
    %v1684 = vadd.f32 0.0, %v1683
    %1685 = vdwg.mxu0
    %v1686 = vsel %vm154, %v1594, 0.0
    %v1687 = vsel %vm154, %v1623, 0.0
    %v1688 = vadd.f32 %v1686, %v1687
    %v1689 = vsel %vm154, %v1652, 0.0
    %v1690 = vadd.f32 %v1688, %v1689
    %v1691 = vsel %vm154, %v1681, 0.0
    %v1692 = vadd.f32 %v1690, %v1691
    %v1693 = vsel %vm158, %v1597, 0.0
    %v1694 = vsel %vm158, %v1626, 0.0
    %v1695 = vadd.f32 %v1693, %v1694
    %v1696 = vsel %vm158, %v1655, 0.0
    %v1697 = vadd.f32 %v1695, %v1696
    %v1698 = vsel %vm158, %v1684, 0.0
    %v1699 = vadd.f32 %v1697, %v1698
    %v1700 = vadd.f32 %v1010, %v1692
    %v1701 = vadd.f32 %v1011, %v1699
    %s1702 = scalar_lea.vmem %s9, 1
    %v1703 = vld [vmem:[%s1702] sm:$0x1]
    %v1705 = vperm.slane %v1703, 0
    %v1707 = vadd.f32 %v1700, %v1705
    %v1708 = vadd.f32 %v1701, %v1705
    %s1709 = scalar_lea.vmem %s10, 1
    %v1710 = vld [vmem:[%s1709] sm:$0x1]
    %s1711 = scalar_lea.vmem %s11, 1
    %v1712 = vld [vmem:[%s1711] sm:$0x1]
    %v1713 = vsel %vm154, %v1707, 0.0
    %1714 = vadd.xlane.f32.xlu0 %v1713
    %v1715 = vpop.xlane.xlu0 %1714
    %v1716 = vsel %vm158, %v1708, 0.0
    %1717 = vadd.xlane.f32.xlu0 %v1716
    %v1718 = vpop.xlane.xlu0 %1717
    %v1719 = vmul.f32 %v1715, %v168
    %v1720 = vmul.f32 %v1718, %v168
    %v1721 = vsub.f32 %v1707, %v1719
    %v1722 = vsub.f32 %v1708, %v1720
    %v1723 = vmul.f32 %v1721, %v1721
    %v1724 = vmul.f32 %v1722, %v1722
    %v1725 = vsel %vm154, %v1723, 0.0
    %1726 = vadd.xlane.f32.xlu0 %v1725
    %v1727 = vpop.xlane.xlu0 %1726
    %v1728 = vsel %vm158, %v1724, 0.0
    %1729 = vadd.xlane.f32.xlu0 %v1728
    %v1730 = vpop.xlane.xlu0 %1729
    %v1731 = vmul.f32 %v1727, %v168
    %v1732 = vmul.f32 %v1730, %v168
    %v1733 = vadd.f32 %v1731, 1e-05
    %v1734 = vadd.f32 %v1732, 1e-05
    %v1735 = vrsqrt.pop %v1733
    %v1736 = vmul.f32 %v1735, %v1733
    %v1737 = vmul.f32 %v1736, %v1735
    %v1738 = vmul.f32 0.5, %v1737
    %v1739 = vsub.f32 1.5, %v1738
    %v1740 = vmul.f32 %v1735, %v1739
    %vm1741 = vweird.f32 %v1733
    %vm1742 = vweird.f32 %v1735
    %vm1743 = vmor %vm1741, %vm1742
    %v1744 = vsel %vm1743, %v1735, %v1740
    %v1745 = vrsqrt.pop %v1734
    %v1746 = vmul.f32 %v1745, %v1734
    %v1747 = vmul.f32 %v1746, %v1745
    %v1748 = vmul.f32 0.5, %v1747
    %v1749 = vsub.f32 1.5, %v1748
    %v1750 = vmul.f32 %v1745, %v1749
    %vm1751 = vweird.f32 %v1734
    %vm1752 = vweird.f32 %v1745
    %vm1753 = vmor %vm1751, %vm1752
    %v1754 = vsel %vm1753, %v1745, %v1750
    %v1755 = vmul.f32 %v1721, %v1744
    %v1756 = vmul.f32 %v1722, %v1754
    %v1758 = vperm.slane %v1710, 0
    %v1760 = vmul.f32 %v1755, %v1758
    %v1761 = vmul.f32 %v1756, %v1758
    %v1763 = vperm.slane %v1712, 0
    %v1765 = vadd.f32 %v1760, %v1763
    %v1766 = vadd.f32 %v1761, %v1763
    %s1767 = scalar_lea.vmem %s12, 32
    %v1768 = vld [vmem:[%s1767] sm:$0xff]
    %v1769 = vld [vmem:[%s1767 + $0x8] sm:$0xff]
    %v1770 = vld [vmem:[%s1767 + $0x10] sm:$0xff]
    %v1771 = vld [vmem:[%s1767 + $0x18] sm:$0xff]
    %s1772 = scalar_lea.vmem %s13, 1
    %v1773 = vld [vmem:[%s1772] sm:$0x1]
    %v1775 = vperm.slane %v1773, 0
    %v1778 = vsel %vm154, %v1765, 0
    %v1781 = vsel %vm154, %v1766, 0
    %1783 = vmatpush.msra.mxu0 0.0
    %1784 = vmatpush.msra.mxu0 0.0
    %1785 = vmatpush.msra.mxu0 0.0
    %1786 = vmatpush.msra.mxu0 0.0
    %1787 = vmatpush.msra.mxu0 0.0
    %1788 = vmatpush.msra.mxu0 0.0
    %1789 = vmatpush.msra.mxu0 0.0
    %1790 = vmatpush.msra.mxu0 0.0
    %1791 = vmatpush.msra.mxu0 0.0
    %1792 = vmatpush.msra.mxu0 0.0
    %1793 = vmatpush.msra.mxu0 0.0
    %1794 = vmatpush.msra.mxu0 0.0
    %1795 = vmatpush.msra.mxu0 %v1771
    %1796 = vmatpush.msra.mxu0 %v1770
    %1797 = vmatpush.msra.mxu0 %v1769
    %1798 = vmatpush.msra.mxu0 %v1768
    %1799 = vmatmul.f32.gmra.mxu0 %v1778
    %v1800 = vpop.f32.mrf.mxu0
    %v1801 = vadd.f32 %v1775, %v1800
    %1802 = vmatmul.f32.gmra.mxu0 %v1781
    %v1803 = vpop.f32.mrf.mxu0
    %v1804 = vadd.f32 %v1775, %v1803
    %1805 = vdwg.mxu0
    %v1806 = vmul.f32 %v1801, %v1801
    %v1807 = vmul.f32 %v1804, %v1804
    %v1808 = vmul.f32 %v1801, %v1806
    %v1809 = vmul.f32 %v1804, %v1807
    %v1810 = vmul.f32 %v1808, 0.044715
    %v1811 = vmul.f32 %v1809, 0.044715
    %v1812 = vadd.f32 %v1801, %v1810
    %v1813 = vadd.f32 %v1804, %v1811
    %v1814 = vmul.f32 %v1812, 0.7978846
    %v1815 = vmul.f32 %v1813, 0.7978846
    %v1816 = vtanh.pop %v1814
    %v1817 = vtanh.pop %v1815
    %v1818 = vadd.f32 %v1816, 1.0
    %v1819 = vadd.f32 %v1817, 1.0
    %v1820 = vmul.f32 %v1818, 0.5
    %v1821 = vmul.f32 %v1819, 0.5
    %v1822 = vmul.f32 %v1801, %v1820
    %v1823 = vmul.f32 %v1804, %v1821
    %s1824 = scalar_lea.vmem %s14, 64
    %v1825 = vld [vmem:[%s1824] sm:$0xff]
    %v1826 = vld [vmem:[%s1824 + $0x8] sm:$0xff]
    %v1827 = vld [vmem:[%s1824 + $0x10] sm:$0xff]
    %v1828 = vld [vmem:[%s1824 + $0x18] sm:$0xff]
    %v1829 = vld [vmem:[%s1824 + $0x20] sm:$0xff]
    %v1830 = vld [vmem:[%s1824 + $0x28] sm:$0xff]
    %v1831 = vld [vmem:[%s1824 + $0x30] sm:$0xff]
    %v1832 = vld [vmem:[%s1824 + $0x38] sm:$0xff]
    %s1833 = scalar_lea.vmem %s15, 1
    %v1834 = vld [vmem:[%s1833] sm:$0x1]
    %v1836 = vperm.slane %v1834, 0
    %v1839 = vsel %vm980, %v1822, 0
    %v1842 = vsel %vm980, %v1823, 0
    %1844 = vmatpush.msra.mxu0 0.0
    %1845 = vmatpush.msra.mxu0 0.0
    %1846 = vmatpush.msra.mxu0 0.0
    %1847 = vmatpush.msra.mxu0 0.0
    %1848 = vmatpush.msra.mxu0 0.0
    %1849 = vmatpush.msra.mxu0 0.0
    %1850 = vmatpush.msra.mxu0 0.0
    %1851 = vmatpush.msra.mxu0 0.0
    %1852 = vmatpush.msra.mxu0 %v1832
    %1853 = vmatpush.msra.mxu0 %v1831
    %1854 = vmatpush.msra.mxu0 %v1830
    %1855 = vmatpush.msra.mxu0 %v1829
    %1856 = vmatpush.msra.mxu0 %v1828
    %1857 = vmatpush.msra.mxu0 %v1827
    %1858 = vmatpush.msra.mxu0 %v1826
    %1859 = vmatpush.msra.mxu0 %v1825
    %1860 = vmatmul.f32.gmra.mxu0 %v1839
    %v1861 = vpop.f32.mrf.mxu0
    %v1862 = vadd.f32 %v1836, %v1861
    %1863 = vmatmul.f32.gmra.mxu0 %v1842
    %v1864 = vpop.f32.mrf.mxu0
    %v1865 = vadd.f32 %v1836, %v1864
    %1866 = vdwg.mxu0
    %v1867 = vadd.f32 %v1707, %v1862
    %v1868 = vadd.f32 %v1708, %v1865
    %v1869 = vld [vmem:[%s3] sm:$0x3]
    %v1871 = vsel %vm480, %v1869, 0
    %v1874 = vsel %vm581, %v1868, 0
    %1876 = vmatpush.msra.mxu0 0.0
    %1877 = vmatpush.msra.mxu0 0.0
    %1878 = vmatpush.msra.mxu0 0.0
    %1879 = vmatpush.msra.mxu0 0.0
    %1880 = vmatpush.msra.mxu0 0.0
    %1881 = vmatpush.msra.mxu0 0.0
    %1882 = vmatpush.msra.mxu0 0.0
    %1883 = vmatpush.msra.mxu0 0.0
    %1884 = vmatpush.msra.mxu0 0.0
    %1885 = vmatpush.msra.mxu0 0.0
    %1886 = vmatpush.msra.mxu0 0.0
    %1887 = vmatpush.msra.mxu0 0.0
    %1888 = vmatpush.msra.mxu0 0.0
    %1889 = vmatpush.msra.mxu0 0.0
    %1890 = vmatpush.msra.mxu0 %v1874
    %1891 = vmatpush.msra.mxu0 %v1867
    %1892 = vmatmul.f32.gmra.mxu0 %v1871
    %v1893 = vpop.f32.mrf.mxu0
    %v1894 = vadd.f32 0.0, %v1893
    %1895 = vdwg.mxu0
    %v1896 = vld [vmem:[%s16] sm:$0x1]
    %v1897 = vld [vmem:[%s17] sm:$0x1]
    %v1898 = vsel %vm158, %v1894, 0.0
    %1899 = vadd.xlane.f32.xlu0 %v1898
    %v1900 = vpop.xlane.xlu0 %1899
    %v1901 = vmul.f32 %v1900, %v168
    %v1902 = vsub.f32 %v1894, %v1901
    %v1903 = vmul.f32 %v1902, %v1902
    %v1904 = vsel %vm158, %v1903, 0.0
    %1905 = vadd.xlane.f32.xlu0 %v1904
    %v1906 = vpop.xlane.xlu0 %1905
    %v1907 = vmul.f32 %v1906, %v168
    %v1908 = vadd.f32 %v1907, 1e-05
    %v1909 = vrsqrt.pop %v1908
    %v1910 = vmul.f32 %v1909, %v1908
    %v1911 = vmul.f32 %v1910, %v1909
    %v1912 = vmul.f32 0.5, %v1911
    %v1913 = vsub.f32 1.5, %v1912
    %v1914 = vmul.f32 %v1909, %v1913
    %vm1915 = vweird.f32 %v1908
    %vm1916 = vweird.f32 %v1909
    %vm1917 = vmor %vm1915, %vm1916
    %v1918 = vsel %vm1917, %v1909, %v1914
    %v1919 = vmul.f32 %v1902, %v1918
    %v1921 = vperm.slane %v1896, 0
    %v1923 = vmul.f32 %v1919, %v1921
    %v1925 = vperm.slane %v1897, 0
    %v1927 = vadd.f32 %v1923, %v1925
    %v1928 = vld [vmem:[%s18] sm:$0xff]
    %v1929 = vld [vmem:[%s18 + $0x8] sm:$0xff]
    %v1930 = vld [vmem:[%s18 + $0x10] sm:$0xff]
    %v1931 = vld [vmem:[%s18 + $0x18] sm:$0xff]
    %v1932 = vld [vmem:[%s19] sm:$0x1]
    %v1934 = vperm.slane %v1932, 0
    %v1937 = vsel %vm154, %v1927, 0
    %1939 = vmatpush.msra.mxu0 0.0
    %1940 = vmatpush.msra.mxu0 0.0
    %1941 = vmatpush.msra.mxu0 0.0
    %1942 = vmatpush.msra.mxu0 0.0
    %1943 = vmatpush.msra.mxu0 0.0
    %1944 = vmatpush.msra.mxu0 0.0
    %1945 = vmatpush.msra.mxu0 0.0
    %1946 = vmatpush.msra.mxu0 0.0
    %1947 = vmatpush.msra.mxu0 0.0
    %1948 = vmatpush.msra.mxu0 0.0
    %1949 = vmatpush.msra.mxu0 0.0
    %1950 = vmatpush.msra.mxu0 0.0
    %1951 = vmatpush.msra.mxu0 %v1931
    %1952 = vmatpush.msra.mxu0 %v1930
    %1953 = vmatpush.msra.mxu0 %v1929
    %1954 = vmatpush.msra.mxu0 %v1928
    %1955 = vmatmul.f32.gmra.mxu0 %v1937
    %v1956 = vpop.f32.mrf.mxu0
    %v1957 = vadd.f32 %v1934, %v1956
    %1958 = vdwg.mxu0
    %1959 = vst [vmem:[#allocation2] sm:$0x3] %v1957
    // Predicated region
    $region82: #{tpu_custom_call.1} parent=1 // pred_check
      _
    $region83: #{tpu_custom_call.1} parent=1 // pred_check_branch
      %1961 = sbr.rel (0) target = $region85
    $region84: #{tpu_custom_call.1} parent=1 // pred_region
      %1963 = vsyncadd [#allocation3], 0
      %s1965 = sshll.u32 [#allocation2], 4
      %s1966 = int_to_ptr.vmem [resolvable:$true] %s1965
      %s1967 = sshll.u32 %s20, 4
      %s1968 = int_to_ptr.hbm [resolvable:$true] %s1967
      %1970 = dma.vmem_to_hbm [thread:$0]  %s1966, 32, %s1968, [#allocation3]
    $region85: #{tpu_custom_call.1} parent=1 // pred_fallthru
      _
    // Predicated region
    $region86: #{tpu_custom_call.1} parent=1 // pred_check
      _
    $region87: #{tpu_custom_call.1} parent=1 // pred_check_branch
      %1972 = sbr.rel (0) target = $region89
    $region88: #{tpu_custom_call.1} parent=1 // pred_region
      %1974 = dma.done [#allocation3], 32
    $region89: #{tpu_custom_call.1} parent=1 // pred_fallthru
      _
    %1975 = vsyncpa [#allocation3], 1

</llo_original>
